<compile_context>
chip_gen: v5e
topology: v5e:2x2
jax: 0.10.0
libtpu: 0.0.40
codegen_flags: <defaults>
</compile_context>

<pallas_src>
import jax
import jax.numpy as jnp
import numpy as np
from jax import lax
from jax.experimental import pallas as pl
from jax.experimental.pallas import tpu as pltpu

_POOL_K = 31                          # F.avg_pool2d kernel_size
_POOL_R = _POOL_K // 2                # padding = 15
_POOL_DIV = float(_POOL_K * _POOL_K)  # count_include_pad=True -> always /961
_OUT_LANES = 128                      # lane-dense partial-sum output row


def _band_matrix(n, radius=_POOL_R):
    """(n, n) bf16 band matrix: 1 where |i - j| <= radius else 0 (built on host)."""
    idx = np.arange(n)
    band = (np.abs(idx[:, None] - idx[None, :]) <= radius).astype(np.float32)
    return jnp.asarray(band, dtype=jnp.bfloat16)


def _auto_block_images(n_images, h, w):
    """Pick TB against a conservative VMEM budget and keep >= 2 grid steps."""
    # per-image working set: double-buffered f32 pred + bf16 mask + ~10 live f32 temps
    per_img = h * w * (2 * 4 + 2 * 2 + 10 * 4)
    budget = 40 << 20                         # safe across v5e/v6e/v7x scoped VMEM
    tb = max(1, min(8, budget // max(per_img, 1)))
    if n_images >= 2:
        # >= 2 "parallel" grid steps so v7x can use both TensorCores.
        tb = min(tb, (n_images + 1) // 2)
    return max(1, int(tb))


def _vmem_limit_bytes(tb, h, w):
    """Explicit scoped-VMEM request sized to the block working set."""
    blk = tb * h * w
    need = (2 * blk * 4                     # pred block, double-buffered f32
            + 2 * blk * 2                   # mask block, double-buffered bf16
            + 2 * (w * w + h * h) * 2       # resident band matrices (bf16)
            + 12 * blk * 4                  # live f32 temporaries in the body
            + (2 << 20))                    # slack for compiler-internal scratch
    # Floor above every generation's default; ceiling safe even on v7x (64 MiB).
    return int(min(max(need, 32 << 20), 56 << 20))


def _structure_loss_kernel(pred_ref, mask_ref, aw_ref, ah_ref, out_ref):
    tb, h, w = pred_ref.shape

    x = pred_ref[...]                       # (TB, H, W) f32 logits
    m_bf = mask_ref[...]                    # (TB, H, W) bf16 targets (binary 0/1)
    m = m_bf.astype(jnp.float32)

    a_w = aw_ref[...]                       # (W, W) bf16 band matrix (resident)
    a_h = ah_ref[...]                       # (H, H) bf16 band matrix (resident)

    # ---- 31x31 box sum as two band-matrix MXU matmuls (bf16 in, f32 acc) ---
    if h % 8 == 0:
        # Layout-friendly merge of leading dims -> one (TB*H, W) @ (W, W) matmul.
        t = jnp.dot(m_bf.reshape(tb * h, w), a_w,
                    preferred_element_type=jnp.float32).reshape(tb, h, w)
    else:
        # Fallback: batched form, no reshape needed.
        a_w_b = jnp.broadcast_to(a_w[None], (tb, w, w))
        t = jnp.einsum('bhw,bwv->bhv', m_bf, a_w_b,
                       preferred_element_type=jnp.float32)

    # H-pass: batched matmul with the resident band matrix broadcast over the
    # block (cheap copy; avoids any transpose/relayout of the data tensor).
    a_h_b = jnp.broadcast_to(a_h[None], (tb, h, h))
    box = jnp.einsum('bhk,bkw->bhw', a_h_b, t.astype(jnp.bfloat16),
                     preferred_element_type=jnp.float32)
    pooled = box * (1.0 / _POOL_DIV)
    weit = 1.0 + 5.0 * jnp.abs(pooled - m)

    # ---- elementwise epilogue: BCE-with-logits + sigmoid share one exp -----
    e = jnp.exp(-jnp.abs(x))                       # single EUP exp
    bce = jnp.maximum(x, 0.0) - x * m + jnp.log1p(e)

    def _per_image_sum(q):                         # (TB,H,W) -> (TB,1,1)
        s = jnp.sum(q, axis=2, keepdims=True)      # lane (W) reduce
        return jnp.sum(s, axis=1, keepdims=True)   # sublane (H) reduce

    bce_s = _per_image_sum(bce)                    # consume bce early

    inv = 1.0 / (1.0 + e)                          # exact divide: keeps strict
                                                   # parity with PyTorch sigmoid
    sig = jnp.where(x >= 0.0, inv, e * inv)

    inter_s = _per_image_sum(sig * m * weit)
    union_s = _per_image_sum((sig + m) * weit)

    # Pack per-image partial sums into a lane-dense (TB, 1, 128) tile:
    #   lane 0 = sum(BCE), lane 1 = inter, lane 2 = union, rest 0.
    lane = lax.broadcasted_iota(jnp.int32, (tb, 1, _OUT_LANES), 2)
    out_ref[...] = jnp.where(lane == 0, bce_s,
                             jnp.where(lane == 1, inter_s,
                                       jnp.where(lane == 2, union_s, 0.0)))


def structure_loss(pred, mask, *, block_images=None):
    """Pallas TPU StructureLoss.  pred, mask: (B, C, H, W) float (NCHW).

    The mask is transported to the kernel in bfloat16, which is exact for
    binary (0/1) segmentation masks (the intended use of this loss); soft
    float targets would pick up a small bf16 rounding error in the pooling
    and weighting terms.

    block_images (TB) images are processed per grid step.  If None, TB is
    auto-sized against a ~40 MiB VMEM budget and capped so the grid has at
    least two "parallel" steps (both v7x TensorCores get work).
    """
    B, C, H, W = pred.shape
    N = B * C
    if block_images is None:
        tb = _auto_block_images(N, H, W)
    else:
        tb = max(1, min(int(block_images), N))
    n_blocks = pl.cdiv(N, tb)
    n_pad = n_blocks * tb

    pred3 = pred.reshape(N, H, W).astype(jnp.float32)
    mask3 = mask.reshape(N, H, W).astype(jnp.bfloat16)   # exact for 0/1 masks
    if n_pad != N:
        pad = ((0, n_pad - N), (0, 0), (0, 0))
        pred3 = jnp.pad(pred3, pad)
        mask3 = jnp.pad(mask3, pad)

    a_w = _band_matrix(W)                  # resident bf16 band matrices
    a_h = _band_matrix(H)

    cost = pl.CostEstimate(
        flops=int(2 * n_pad * H * W * (H + W) + 24 * n_pad * H * W),
        transcendentals=int(2 * n_pad * H * W),
        bytes_accessed=int(n_pad * H * W * (4 + 2)
                           + (H * H + W * W) * 2
                           + n_pad * _OUT_LANES * 4),
    )

    partials = pl.pallas_call(
        _structure_loss_kernel,
        out_shape=jax.ShapeDtypeStruct((n_pad, 1, _OUT_LANES), jnp.float32),
        grid_spec=pltpu.PrefetchScalarGridSpec(
            num_scalar_prefetch=0,
            grid=(n_blocks,),
            in_specs=[
                pl.BlockSpec((tb, H, W), lambda i: (i, 0, 0)),   # pred block (f32)
                pl.BlockSpec((tb, H, W), lambda i: (i, 0, 0)),   # mask block (bf16)
                pl.BlockSpec((W, W), lambda i: (0, 0)),          # A_W, resident
                pl.BlockSpec((H, H), lambda i: (0, 0)),          # A_H, resident
            ],
            out_specs=pl.BlockSpec((tb, 1, _OUT_LANES), lambda i: (i, 0, 0)),
        ),
        # No cross-step state -> fully parallel grid (both TCs on v7x).
        compiler_params=pltpu.CompilerParams(
            dimension_semantics=("parallel",),
            vmem_limit_bytes=_vmem_limit_bytes(tb, H, W)),
        cost_estimate=cost,
    )(pred3, mask3, a_w, a_h)

    vals = partials[:N, 0, :3]            # drop padded images
    bce_sum = vals[:, 0]
    inter = vals[:, 1]
    union = vals[:, 2]

    # Exact PyTorch semantics: legacy reduce='none' -> reduction='mean', so
    # wbce is the global mean BCE scalar and the weighted normalisation is a
    # no-op; loss = wbce + mean(wiou).
    wbce = jnp.sum(bce_sum) / (N * H * W)
    wiou = 1.0 - (inter + 1.0) / (union - inter + 1.0)
    return wbce + jnp.mean(wiou)


def structure_loss_ref(pred, mask):
    """Pure-JAX reference reproducing the PyTorch forward exactly."""
    window = (1, 1, _POOL_K, _POOL_K)
    pad = ((0, 0), (0, 0), (_POOL_R, _POOL_R), (_POOL_R, _POOL_R))
    pooled = lax.reduce_window(mask, 0.0, lax.add, window,
                               (1, 1, 1, 1), pad) / _POOL_DIV
    weit = 1.0 + 5.0 * jnp.abs(pooled - mask)
    bce = jnp.maximum(pred, 0.0) - pred * mask + jnp.log1p(jnp.exp(-jnp.abs(pred)))
    wbce_scalar = jnp.mean(bce)           # reduce='none' (legacy) -> 'mean'
    wbce = (weit * wbce_scalar).sum(axis=(2, 3)) / weit.sum(axis=(2, 3))
    sig = jax.nn.sigmoid(pred)
    inter = (sig * mask * weit).sum(axis=(2, 3))
    union = ((sig + mask) * weit).sum(axis=(2, 3))
    wiou = 1.0 - (inter + 1.0) / (union - inter + 1.0)
    return jnp.mean(wbce + wiou)


if __name__ == "__main__":
    key = jax.random.PRNGKey(0)
    k1, k2 = jax.random.split(key)
    B, C, H, W = 2, 3, 40, 40
    pred = jax.random.normal(k1, (B, C, H, W), dtype=jnp.float32)
    mask = (jax.random.uniform(k2, (B, C, H, W)) > 0.5).astype(jnp.float32)

    ref = structure_loss_ref(pred, mask)

    # Explicit TB=4 -> 2 grid steps, last block padded (exercises padding path).
    loss = jax.block_until_ready(structure_loss(pred, mask, block_images=4))
    np.testing.assert_allclose(np.asarray(loss), np.asarray(ref),
                               rtol=2e-5, atol=2e-5)

    # Auto TB (capped so the parallel grid axis has >= 2 steps).
    loss_auto = jax.block_until_ready(structure_loss(pred, mask))
    np.testing.assert_allclose(np.asarray(loss_auto), np.asarray(ref),
                               rtol=2e-5, atol=2e-5)

    print("KERNEL_OK")
</pallas_src>

<mosaic_0001>
module attributes {stable_mosaic.version = 11 : i64} {
  func.func @_structure_loss_kernel(%arg0: i32, %arg1: memref<4x40x40xf32, #tpu.memory_space<vmem>>, %arg2: memref<4x40x40xbf16, #tpu.memory_space<vmem>>, %arg3: memref<40x40xbf16, #tpu.memory_space<vmem>>, %arg4: memref<40x40xbf16, #tpu.memory_space<vmem>>, %arg5: memref<4x1x128xf32, #tpu.memory_space<vmem>>) attributes {dimension_semantics = [#tpu.dimension_semantics<parallel>], iteration_bounds = array<i64: 2>, scalar_prefetch = 0 : i64, scratch_operands = 0 : i64, tpu.core_type = #tpu.core_type<tc>, window_params = [{transform_indices = @transform_0, window_bounds = array<i64: 4, 40, 40>}, {transform_indices = @transform_1, window_bounds = array<i64: 4, 40, 40>}, {pipeline_mode = #tpu.pipeline_mode<synchronous>, transform_indices = @transform_2, window_bounds = array<i64: 40, 40>}, {pipeline_mode = #tpu.pipeline_mode<synchronous>, transform_indices = @transform_3, window_bounds = array<i64: 40, 40>}, {transform_indices = @transform_4, window_bounds = array<i64: 4, 1, 128>}]} {
    %c0 = arith.constant 0 : index
    %c0_0 = arith.constant 0 : index
    %c0_1 = arith.constant 0 : index
    %0 = vector.load %arg1[%c0, %c0_0, %c0_1] : memref<4x40x40xf32, #tpu.memory_space<vmem>>, vector<4x40x40xf32>
    %c0_2 = arith.constant 0 : index
    %c0_3 = arith.constant 0 : index
    %c0_4 = arith.constant 0 : index
    %1 = vector.load %arg2[%c0_2, %c0_3, %c0_4] : memref<4x40x40xbf16, #tpu.memory_space<vmem>>, vector<4x40x40xbf16>
    %2 = arith.extf %1 : vector<4x40x40xbf16> to vector<4x40x40xf32>
    %c0_5 = arith.constant 0 : index
    %c0_6 = arith.constant 0 : index
    %3 = vector.load %arg3[%c0_5, %c0_6] : memref<40x40xbf16, #tpu.memory_space<vmem>>, vector<40x40xbf16>
    %c0_7 = arith.constant 0 : index
    %c0_8 = arith.constant 0 : index
    %4 = vector.load %arg4[%c0_7, %c0_8] : memref<40x40xbf16, #tpu.memory_space<vmem>>, vector<40x40xbf16>
    %5 = vector.shape_cast %1 : vector<4x40x40xbf16> to vector<160x40xbf16>
    %cst = arith.constant dense<0.000000e+00> : vector<160x40xf32>
    %6 = tpu.matmul %5, %3, %cst {dimension_numbers = #tpu.dot_dimension_numbers<[1], [0], [0], [1], [0, 0, 1, 1], [], []>} : vector<160x40xbf16>, vector<40x40xbf16>, vector<160x40xf32> -> vector<160x40xf32>
    %7 = vector.shape_cast %6 : vector<160x40xf32> to vector<4x40x40xf32>
    %8 = vector.shape_cast %4 : vector<40x40xbf16> to vector<1x40x40xbf16>
    %9 = vector.shape_cast %8 : vector<1x40x40xbf16> to vector<1x40x40xbf16>
    %10 = vector.broadcast %9 : vector<1x40x40xbf16> to vector<4x40x40xbf16>
    %11 = arith.truncf %7 : vector<4x40x40xf32> to vector<4x40x40xbf16>
    "tpu.trace_start"() <{level = 10 : i32, message = "bhk,bkw->bhw"}> : () -> ()
    %cst_9 = arith.constant dense<0.000000e+00> : vector<4x40x40xf32>
    %12 = tpu.matmul %10, %11, %cst_9 {dimension_numbers = #tpu.dot_dimension_numbers<[2], [1], [1], [2], [0, 0, 0, 1, 1, 2], [0], [0]>} : vector<4x40x40xbf16>, vector<4x40x40xbf16>, vector<4x40x40xf32> -> vector<4x40x40xf32>
    "tpu.trace_stop"() : () -> ()
    %cst_10 = arith.constant 0.00104058278 : f32
    %13 = vector.broadcast %cst_10 : f32 to vector<4x40x40xf32>
    %14 = arith.mulf %12, %13 : vector<4x40x40xf32>
    %15 = arith.subf %14, %2 : vector<4x40x40xf32>
    %16 = math.absf %15 : vector<4x40x40xf32>
    %cst_11 = arith.constant 5.000000e+00 : f32
    %17 = vector.broadcast %cst_11 : f32 to vector<4x40x40xf32>
    %18 = arith.mulf %17, %16 : vector<4x40x40xf32>
    %cst_12 = arith.constant 1.000000e+00 : f32
    %19 = vector.broadcast %cst_12 : f32 to vector<4x40x40xf32>
    %20 = arith.addf %19, %18 : vector<4x40x40xf32>
    %21 = math.absf %0 : vector<4x40x40xf32>
    %cst_13 = arith.constant 0.000000e+00 : f32
    %22 = vector.broadcast %cst_13 : f32 to vector<4x40x40xf32>
    %23 = arith.subf %22, %21 : vector<4x40x40xf32>
    %24 = math.exp %23 : vector<4x40x40xf32>
    %cst_14 = arith.constant 0.000000e+00 : f32
    %25 = vector.broadcast %cst_14 : f32 to vector<4x40x40xf32>
    %26 = arith.maximumf %0, %25 : vector<4x40x40xf32>
    %27 = arith.mulf %0, %2 : vector<4x40x40xf32>
    %28 = arith.subf %26, %27 : vector<4x40x40xf32>
    %29 = math.log1p %24 : vector<4x40x40xf32>
    %30 = arith.addf %28, %29 : vector<4x40x40xf32>
    %cst_15 = arith.constant dense<0.000000e+00> : vector<4x40xf32>
    %31 = vector.multi_reduction <add>, %30, %cst_15 [2] : vector<4x40x40xf32> to vector<4x40xf32>
    %32 = vector.shape_cast %31 : vector<4x40xf32> to vector<4x40x1xf32>
    %cst_16 = arith.constant dense<0.000000e+00> : vector<4x1xf32>
    %33 = vector.multi_reduction <add>, %32, %cst_16 [1] : vector<4x40x1xf32> to vector<4x1xf32>
    %34 = vector.shape_cast %33 : vector<4x1xf32> to vector<4x1x1xf32>
    %cst_17 = arith.constant 1.000000e+00 : f32
    %35 = vector.broadcast %cst_17 : f32 to vector<4x40x40xf32>
    %36 = arith.addf %35, %24 : vector<4x40x40xf32>
    %cst_18 = arith.constant 1.000000e+00 : f32
    %37 = vector.broadcast %cst_18 : f32 to vector<4x40x40xf32>
    %38 = arith.divf %37, %36 : vector<4x40x40xf32>
    %cst_19 = arith.constant 0.000000e+00 : f32
    %39 = vector.broadcast %cst_19 : f32 to vector<4x40x40xf32>
    %40 = arith.cmpf oge, %0, %39 : vector<4x40x40xf32>
    %41 = arith.mulf %24, %38 : vector<4x40x40xf32>
    %42 = arith.select %40, %38, %41 : vector<4x40x40xi1>, vector<4x40x40xf32>
    %43 = arith.mulf %42, %2 : vector<4x40x40xf32>
    %44 = arith.mulf %43, %20 : vector<4x40x40xf32>
    %cst_20 = arith.constant dense<0.000000e+00> : vector<4x40xf32>
    %45 = vector.multi_reduction <add>, %44, %cst_20 [2] : vector<4x40x40xf32> to vector<4x40xf32>
    %46 = vector.shape_cast %45 : vector<4x40xf32> to vector<4x40x1xf32>
    %cst_21 = arith.constant dense<0.000000e+00> : vector<4x1xf32>
    %47 = vector.multi_reduction <add>, %46, %cst_21 [1] : vector<4x40x1xf32> to vector<4x1xf32>
    %48 = vector.shape_cast %47 : vector<4x1xf32> to vector<4x1x1xf32>
    %49 = arith.addf %42, %2 : vector<4x40x40xf32>
    %50 = arith.mulf %49, %20 : vector<4x40x40xf32>
    %cst_22 = arith.constant dense<0.000000e+00> : vector<4x40xf32>
    %51 = vector.multi_reduction <add>, %50, %cst_22 [2] : vector<4x40x40xf32> to vector<4x40xf32>
    %52 = vector.shape_cast %51 : vector<4x40xf32> to vector<4x40x1xf32>
    %cst_23 = arith.constant dense<0.000000e+00> : vector<4x1xf32>
    %53 = vector.multi_reduction <add>, %52, %cst_23 [1] : vector<4x40x1xf32> to vector<4x1xf32>
    %54 = vector.shape_cast %53 : vector<4x1xf32> to vector<4x1x1xf32>
    %55 = tpu.iota {dimensions = array<i32: 2>} : vector<4x1x128xi32>
    %c0_i32 = arith.constant 0 : i32
    %56 = vector.broadcast %c0_i32 : i32 to vector<4x1x128xi32>
    %57 = arith.cmpi eq, %55, %56 : vector<4x1x128xi32>
    %c1_i32 = arith.constant 1 : i32
    %58 = vector.broadcast %c1_i32 : i32 to vector<4x1x128xi32>
    %59 = arith.cmpi eq, %55, %58 : vector<4x1x128xi32>
    %c2_i32 = arith.constant 2 : i32
    %60 = vector.broadcast %c2_i32 : i32 to vector<4x1x128xi32>
    %61 = arith.cmpi eq, %55, %60 : vector<4x1x128xi32>
    %cst_24 = arith.constant 0.000000e+00 : f32
    %62 = vector.shape_cast %54 : vector<4x1x1xf32> to vector<4x1x1xf32>
    %63 = vector.broadcast %62 : vector<4x1x1xf32> to vector<4x1x128xf32>
    %64 = vector.broadcast %cst_24 : f32 to vector<4x1x128xf32>
    %65 = arith.select %61, %63, %64 : vector<4x1x128xi1>, vector<4x1x128xf32>
    %66 = vector.shape_cast %48 : vector<4x1x1xf32> to vector<4x1x1xf32>
    %67 = vector.broadcast %66 : vector<4x1x1xf32> to vector<4x1x128xf32>
    %68 = arith.select %59, %67, %65 : vector<4x1x128xi1>, vector<4x1x128xf32>
    %69 = vector.shape_cast %34 : vector<4x1x1xf32> to vector<4x1x1xf32>
    %70 = vector.broadcast %69 : vector<4x1x1xf32> to vector<4x1x128xf32>
    %71 = arith.select %57, %70, %68 : vector<4x1x128xi1>, vector<4x1x128xf32>
    %c0_25 = arith.constant 0 : index
    %c0_26 = arith.constant 0 : index
    %c0_27 = arith.constant 0 : index
    %72 = vector.load %arg5[%c0_25, %c0_26, %c0_27] : memref<4x1x128xf32, #tpu.memory_space<vmem>>, vector<4x1x128xf32>
    tpu.vector_store %arg5[%c0_25, %c0_26, %c0_27], %71 {strides = array<i32>} : memref<4x1x128xf32, #tpu.memory_space<vmem>>, vector<4x1x128xf32>,
    return
  }
  func.func @transform_0(%arg0: i32) -> (i32, i32, i32) {
    %c0_i32 = arith.constant 0 : i32
    %c0_i32_0 = arith.constant 0 : i32
    %c0_i32_1 = arith.constant 0 : i32
    return %arg0, %c0_i32, %c0_i32_0 : i32, i32, i32
  }
  func.func @transform_1(%arg0: i32) -> (i32, i32, i32) {
    %c0_i32 = arith.constant 0 : i32
    %c0_i32_0 = arith.constant 0 : i32
    %c0_i32_1 = arith.constant 0 : i32
    return %arg0, %c0_i32, %c0_i32_0 : i32, i32, i32
  }
  func.func @transform_2(%arg0: i32) -> (i32, i32) {
    %c0_i32 = arith.constant 0 : i32
    %c0_i32_0 = arith.constant 0 : i32
    %c0_i32_1 = arith.constant 0 : i32
    return %c0_i32, %c0_i32_0 : i32, i32
  }
  func.func @transform_3(%arg0: i32) -> (i32, i32) {
    %c0_i32 = arith.constant 0 : i32
    %c0_i32_0 = arith.constant 0 : i32
    %c0_i32_1 = arith.constant 0 : i32
    return %c0_i32, %c0_i32_0 : i32, i32
  }
  func.func @transform_4(%arg0: i32) -> (i32, i32, i32) {
    %c0_i32 = arith.constant 0 : i32
    %c0_i32_0 = arith.constant 0 : i32
    %c0_i32_1 = arith.constant 0 : i32
    return %arg0, %c0_i32, %c0_i32_0 : i32, i32, i32
  }
}

</mosaic_0001>

<llo_original>
// kernel: tpu_custom_call.1
$region0: #{tpu_custom_call.1}
  #allocation0 [shape = 'u32[]', space=smem, size = 0x4, offset = 0x4, fixed_abs, tag = 'smem constant byte address 0x4 - core index']
  #allocation1 [shape = 'u32[72,128]{1,0:T(1,128)}', space=vmem, size = 0x9000, scoped, tag = 'internal scratch']
  %s0 = inlined_call_operand.hbm [shape: f32[8,40,40], index: 0, kind: input, shape index: {}]
  %s1 = inlined_call_operand.hbm [shape: bf16[8,40,40], index: 1, kind: input, shape index: {}]
  %s2 = inlined_call_operand.hbm [shape: bf16[40,40], index: 2, kind: input, shape index: {}]
  %s3 = inlined_call_operand.hbm [shape: bf16[40,40], index: 3, kind: input, shape index: {}]
  %s4 = inlined_call_operand.hbm [shape: f32[8,1,128], index: 4, kind: output, shape index: {}]
  %s5 = sld [smem:[#allocation0]]
  $region65: #{tpu_custom_call.1} parent=0
    _
  %s7 = ssub.s32 1, %s5
  %s8 = scalar_select 0, %s7, %s5
  $region1: #{tpu_custom_call.1} parent=0
    #allocation2 [shape = 'u8[163840]{0}', space=vmem, size = 0x28000, scoped, tag = 'input window, operand 0']
    #allocation3 [shape = 's32[2]{0}', space=sflag, size = 0x8, scoped, tag = 'scoped memory for tpu_custom_call.1']
    #allocation4 [shape = 's32[2]{0}', space=sflag, size = 0x8, scoped, tag = 'scoped memory for tpu_custom_call.1']
    #allocation5 [shape = 'u8[81920]{0}', space=vmem, size = 0x14000, scoped, tag = 'input window, operand 1']
    #allocation6 [shape = 's32[2]{0}', space=sflag, size = 0x8, scoped, tag = 'scoped memory for tpu_custom_call.1']
    #allocation7 [shape = 'u8[10240]{0}', space=vmem, size = 0x2800, scoped, tag = 'input window, operand 2, single buffered']
    #allocation8 [shape = 'u8[10240]{0}', space=vmem, size = 0x2800, scoped, tag = 'input window, operand 3, single buffered']
    #allocation9 [shape = 's32[1]{0}', space=sflag, size = 0x4, scoped, tag = 'scoped memory for tpu_custom_call.1']
    #allocation10 [shape = 'u8[4096]{0}', space=vmem, size = 0x1000, scoped, tag = 'output window, operand 0']
    %9 = vsyncpa [#allocation3], 0
    %s10 = scalar_lea.sflag [#allocation3], 1
    %11 = vsyncpa %s10, 0
    %12 = vsyncpa [#allocation6], 0
    %s13 = scalar_lea.sflag [#allocation6], 1
    %14 = vsyncpa %s13, 0
    %15 = vsyncpa [#allocation9], 0
    %16 = vsyncpa [#allocation4], 0
    %s17 = scalar_lea.sflag [#allocation4], 1
    %18 = vsyncpa %s17, 0
    loop: start=0, step=1, limit=4
    $region2: #{tpu_custom_call.1} parent=1 // loop_pre_header
      _
    $region3: #{tpu_custom_call.1} parent=1 // loop_header
      %s20 = sphi 0, %s24
      %p21 = scmp.ge.s32.totalorder %s20, 4
      %s30 = sphi 0, %s32
      %s33 = sphi 0, %s30
      %s34 = sphi 0, %s33
      %s50 = sphi 0, %s34
      %s56 = sphi 0, %s58
      %s59 = sphi 0, %s56
      %s60 = sphi 0, %s59
      %s76 = sphi 0, %s60
      %s80 = sphi 0, %s80
      %s82 = sphi 0, %s80
      %s83 = sphi 0, %s82
      %s97 = sphi 0, %s83
      %s101 = sphi 0, %s101
      %s103 = sphi 0, %s101
      %s104 = sphi 0, %s103
      %s118 = sphi 0, %s104
      %s124 = sphi 0, %s126
      %s127 = sphi 0, %s124
      %s128 = sphi 0, %s127
      %s144 = sphi 0, %s128
    $region4: #{tpu_custom_call.1} parent=1 // loop_header_branch
      %23 = sbr.rel (%p21) target = $region8
    $region5: #{tpu_custom_call.1} parent=1 // loop_body
      %s25 = ssub.s32 %s20, 1
      %s26 = ssub.s32 %s20, 2
      %s27 = sadd.s32 %s20, 1
      %s28 = ssub.s32 %s20, %s27
      %p29 = scmp.eq.s32.totalorder %s28, 0
      %s31 = sadd.s32 %s30, 1
      %s32 = scalar_select %p29, %s30, %s31
      %p35 = pneg %p29
      %p36 = scmp.eq.s32.totalorder %s20, 1
      %p37 = por %p35, %p36
      %p38 = scmp.ne.s32.totalorder %s30, %s33
      %p39 = scmp.eq.s32.totalorder %s20, 0
      %p40 = por %p38, %p39
      %p41 = scmp.ne.s32.totalorder %s30, %s33
      %p42 = scmp.eq.s32.totalorder %s25, 1
      %p43 = por %p41, %p42
      %p44 = scmp.ne.s32.totalorder %s33, %s34
      %p45 = scmp.eq.s32.totalorder %s25, 0
      %p46 = por %p44, %p45
      %p47 = scmp.ne.s32.totalorder %s33, %s34
      %p48 = scmp.eq.s32.totalorder %s26, 1
      %p49 = por %p47, %p48
      %p51 = scmp.ne.s32.totalorder %s34, %s50
      %p52 = scmp.eq.s32.totalorder %s26, 0
      %p53 = por %p51, %p52
      %s54 = ssub.s32 %s20, %s27
      %p55 = scmp.eq.s32.totalorder %s54, 0
      %s57 = sadd.s32 %s56, 1
      %s58 = scalar_select %p55, %s56, %s57
      %p61 = pneg %p55
      %p62 = scmp.eq.s32.totalorder %s20, 1
      %p63 = por %p61, %p62
      %p64 = scmp.ne.s32.totalorder %s56, %s59
      %p65 = scmp.eq.s32.totalorder %s20, 0
      %p66 = por %p64, %p65
      %p67 = scmp.ne.s32.totalorder %s56, %s59
      %p68 = scmp.eq.s32.totalorder %s25, 1
      %p69 = por %p67, %p68
      %p70 = scmp.ne.s32.totalorder %s59, %s60
      %p71 = scmp.eq.s32.totalorder %s25, 0
      %p72 = por %p70, %p71
      %p73 = scmp.ne.s32.totalorder %s59, %s60
      %p74 = scmp.eq.s32.totalorder %s26, 1
      %p75 = por %p73, %p74
      %p77 = scmp.ne.s32.totalorder %s60, %s76
      %p78 = scmp.eq.s32.totalorder %s26, 0
      %p79 = por %p77, %p78
      %s81 = sadd.s32 %s80, 1
      %p84 = scmp.eq.s32.totalorder %s20, 1
      %p85 = scmp.ne.s32.totalorder %s80, %s82
      %p86 = scmp.eq.s32.totalorder %s20, 0
      %p87 = por %p85, %p86
      %p88 = scmp.ne.s32.totalorder %s80, %s82
      %p89 = scmp.eq.s32.totalorder %s25, 1
      %p90 = por %p88, %p89
      %p91 = scmp.ne.s32.totalorder %s82, %s83
      %p92 = scmp.eq.s32.totalorder %s25, 0
      %p93 = por %p91, %p92
      %p94 = scmp.ne.s32.totalorder %s82, %s83
      %p95 = scmp.eq.s32.totalorder %s26, 1
      %p96 = por %p94, %p95
      %p98 = scmp.ne.s32.totalorder %s83, %s97
      %p99 = scmp.eq.s32.totalorder %s26, 0
      %p100 = por %p98, %p99
      %s102 = sadd.s32 %s101, 1
      %p105 = scmp.eq.s32.totalorder %s20, 1
      %p106 = scmp.ne.s32.totalorder %s101, %s103
      %p107 = scmp.eq.s32.totalorder %s20, 0
      %p108 = por %p106, %p107
      %p109 = scmp.ne.s32.totalorder %s101, %s103
      %p110 = scmp.eq.s32.totalorder %s25, 1
      %p111 = por %p109, %p110
      %p112 = scmp.ne.s32.totalorder %s103, %s104
      %p113 = scmp.eq.s32.totalorder %s25, 0
      %p114 = por %p112, %p113
      %p115 = scmp.ne.s32.totalorder %s103, %s104
      %p116 = scmp.eq.s32.totalorder %s26, 1
      %p117 = por %p115, %p116
      %p119 = scmp.ne.s32.totalorder %s104, %s118
      %p120 = scmp.eq.s32.totalorder %s26, 0
      %p121 = por %p119, %p120
      %s122 = ssub.s32 %s20, %s27
      %p123 = scmp.eq.s32.totalorder %s122, 0
      %s125 = sadd.s32 %s124, 1
      %s126 = scalar_select %p123, %s124, %s125
      %p129 = pneg %p123
      %p130 = scmp.eq.s32.totalorder %s20, 1
      %p131 = por %p129, %p130
      %p132 = scmp.ne.s32.totalorder %s124, %s127
      %p133 = scmp.eq.s32.totalorder %s20, 0
      %p134 = por %p132, %p133
      %p135 = scmp.ne.s32.totalorder %s124, %s127
      %p136 = scmp.eq.s32.totalorder %s25, 1
      %p137 = por %p135, %p136
      %p138 = scmp.ne.s32.totalorder %s127, %s128
      %p139 = scmp.eq.s32.totalorder %s25, 0
      %p140 = por %p138, %p139
      %p141 = scmp.ne.s32.totalorder %s127, %s128
      %p142 = scmp.eq.s32.totalorder %s26, 1
      %p143 = por %p141, %p142
      %p145 = scmp.ne.s32.totalorder %s128, %s144
      %p146 = scmp.eq.s32.totalorder %s26, 0
      %p147 = por %p145, %p146
      %p148 = scmp.le.s32.totalorder 1, %s20
      %p149 = scmp.lt.s32.totalorder %s20, 3
      %p150 = pnand %p148, %p149
      %p151 = pneg %p150
      // Predicated region
      $region9: #{tpu_custom_call.1} parent=5 // pred_check
        _
      $region10: #{tpu_custom_call.1} parent=5 // pred_check_branch
        %153 = sbr.rel (%p150) target = $region12
      $region11: #{tpu_custom_call.1} parent=5 // pred_region
        %s154 = ssub.s32 %s20, 1
        // Predicated region
        $region13: #{tpu_custom_call.1} parent=11 // pred_check
          %p155 = pneg %p93
        $region14: #{tpu_custom_call.1} parent=11 // pred_check_branch
          %157 = sbr.rel (%p155) target = $region16
        $region15: #{tpu_custom_call.1} parent=11 // pred_region
          %159 = vsyncadd [#allocation6], 0
          %s160 = sshll.u32 %s2, 4
          %s161 = int_to_ptr.hbm [resolvable:$true] %s160
          %s162 = sshll.u32 [#allocation7], 4
          %s163 = int_to_ptr.vmem [resolvable:$true] %s162
          %168 = dma.hbm_to_vmem [thread:$0]  %s161, 320, %s163, [#allocation6], 64, 64, 4
        $region16: #{tpu_custom_call.1} parent=11 // pred_fallthru
          _
        // Predicated region
        $region17: #{tpu_custom_call.1} parent=11 // pred_check
          %p169 = pneg %p114
        $region18: #{tpu_custom_call.1} parent=11 // pred_check_branch
          %171 = sbr.rel (%p169) target = $region20
        $region19: #{tpu_custom_call.1} parent=11 // pred_region
          %173 = vsyncadd [#allocation9], 0
          %s174 = sshll.u32 %s3, 4
          %s175 = int_to_ptr.hbm [resolvable:$true] %s174
          %s176 = sshll.u32 [#allocation8], 4
          %s177 = int_to_ptr.vmem [resolvable:$true] %s176
          %182 = dma.hbm_to_vmem [thread:$0]  %s175, 320, %s177, [#allocation9], 64, 64, 4
        $region20: #{tpu_custom_call.1} parent=11 // pred_fallthru
          _
      $region12: #{tpu_custom_call.1} parent=5 // pred_fallthru
        _
      %p183 = scmp.lt.s32.totalorder %s20, 2
      // Predicated region
      $region21: #{tpu_custom_call.1} parent=5 // pred_check
        %p184 = pneg %p183
      $region22: #{tpu_custom_call.1} parent=5 // pred_check_branch
        %186 = sbr.rel (%p184) target = $region24
      $region23: #{tpu_custom_call.1} parent=5 // pred_region
        // Predicated region
        $region25: #{tpu_custom_call.1} parent=23 // pred_check
          %p187 = pneg %p40
        $region26: #{tpu_custom_call.1} parent=23 // pred_check_branch
          %189 = sbr.rel (%p187) target = $region28
        $region27: #{tpu_custom_call.1} parent=23 // pred_region
          %s190 = sand.u32 %s30, 1
          %s191 = scalar_lea.sflag [#allocation3], %s190
          %s192 = sand.u32 %s30, 1
          %s193 = smul.addr %s192, 160
          %s194 = scalar_lea.vmem [#allocation2], %s193
          %s195 = smul.u32 4, %s20
          %197 = vsyncadd %s191, 0
          %s198 = smul.addr %s195, 5
          %s199 = smul.addr %s198, 8
          %s200 = scalar_lea.hbm %s0, %s199
          %s201 = sshll.u32 %s200, 4
          %s202 = int_to_ptr.hbm [resolvable:$true] %s201
          %s203 = sshll.u32 %s194, 4
          %s204 = int_to_ptr.vmem [resolvable:$true] %s203
          %209 = dma.hbm_to_vmem [thread:$0]  %s202, 2560, %s204, %s191, 128, 128, 8
        $region28: #{tpu_custom_call.1} parent=23 // pred_fallthru
          _
        // Predicated region
        $region29: #{tpu_custom_call.1} parent=23 // pred_check
          %p210 = pneg %p66
        $region30: #{tpu_custom_call.1} parent=23 // pred_check_branch
          %212 = sbr.rel (%p210) target = $region32
        $region31: #{tpu_custom_call.1} parent=23 // pred_region
          %s213 = sand.u32 %s20, 1
          %s214 = scalar_lea.sflag [#allocation6], %s213
          %s215 = sand.u32 %s56, 1
          %s216 = smul.addr %s215, 80
          %s217 = scalar_lea.vmem [#allocation5], %s216
          %s218 = smul.u32 4, %s20
          %220 = vsyncadd %s214, 0
          %s221 = smul.addr %s218, 5
          %s222 = smul.addr %s221, 4
          %s223 = scalar_lea.hbm %s1, %s222
          %s224 = sshll.u32 %s223, 4
          %s225 = int_to_ptr.hbm [resolvable:$true] %s224
          %s226 = sshll.u32 %s217, 4
          %s227 = int_to_ptr.vmem [resolvable:$true] %s226
          %232 = dma.hbm_to_vmem [thread:$0]  %s225, 1280, %s227, %s214, 64, 64, 4
        $region32: #{tpu_custom_call.1} parent=23 // pred_fallthru
          _
      $region24: #{tpu_custom_call.1} parent=5 // pred_fallthru
        _
      %p233 = scmp.le.s32.totalorder 1, %s20
      %p234 = scmp.lt.s32.totalorder %s20, 3
      %p235 = pnand %p233, %p234
      %p236 = pneg %p235
      // Predicated region
      $region33: #{tpu_custom_call.1} parent=5 // pred_check
        _
      $region34: #{tpu_custom_call.1} parent=5 // pred_check_branch
        %238 = sbr.rel (%p235) target = $region36
      $region35: #{tpu_custom_call.1} parent=5 // pred_region
        %s239 = ssub.s32 %s20, 1
        %s240 = sand.u32 %s33, 1
        %s241 = scalar_lea.sflag [#allocation3], %s240
        %s242 = sand.u32 %s33, 1
        %s243 = smul.addr %s242, 160
        %s244 = scalar_lea.vmem [#allocation2], %s243
        // Predicated region
        $region37: #{tpu_custom_call.1} parent=35 // pred_check
          %p245 = pneg %p46
        $region38: #{tpu_custom_call.1} parent=35 // pred_check_branch
          %247 = sbr.rel (%p245) target = $region40
        $region39: #{tpu_custom_call.1} parent=35 // pred_region
          %249 = dma.done %s241, 2560
        $region40: #{tpu_custom_call.1} parent=35 // pred_fallthru
          _
        %s250 = sand.u32 %s25, 1
        %s251 = scalar_lea.sflag [#allocation6], %s250
        %s252 = sand.u32 %s59, 1
        %s253 = smul.addr %s252, 80
        %s254 = scalar_lea.vmem [#allocation5], %s253
        // Predicated region
        $region41: #{tpu_custom_call.1} parent=35 // pred_check
          %p255 = pneg %p72
        $region42: #{tpu_custom_call.1} parent=35 // pred_check_branch
          %257 = sbr.rel (%p255) target = $region44
        $region43: #{tpu_custom_call.1} parent=35 // pred_region
          %259 = dma.done %s251, 1280
        $region44: #{tpu_custom_call.1} parent=35 // pred_fallthru
          _
        // Predicated region
        $region45: #{tpu_custom_call.1} parent=35 // pred_check
          %p260 = pneg %p93
        $region46: #{tpu_custom_call.1} parent=35 // pred_check_branch
          %262 = sbr.rel (%p260) target = $region48
        $region47: #{tpu_custom_call.1} parent=35 // pred_region
          %264 = dma.done [#allocation6], 320
        $region48: #{tpu_custom_call.1} parent=35 // pred_fallthru
          _
        // Predicated region
        $region49: #{tpu_custom_call.1} parent=35 // pred_check
          %p265 = pneg %p114
        $region50: #{tpu_custom_call.1} parent=35 // pred_check_branch
          %267 = sbr.rel (%p265) target = $region52
        $region51: #{tpu_custom_call.1} parent=35 // pred_region
          %269 = dma.done [#allocation9], 320
        $region52: #{tpu_custom_call.1} parent=35 // pred_fallthru
          _
        %s270 = sand.u32 %s33, 1
        %s271 = scalar_lea.sflag [#allocation3], %s270
        %s272 = sand.u32 %s33, 1
        %s273 = smul.addr %s272, 160
        %s274 = scalar_lea.vmem [#allocation2], %s273
        %p275 = pneg %p46
        %p276 = pneg %p43
        %s277 = sand.u32 %s25, 1
        %s278 = scalar_lea.sflag [#allocation6], %s277
        %s279 = sand.u32 %s59, 1
        %s280 = smul.addr %s279, 80
        %s281 = scalar_lea.vmem [#allocation5], %s280
        %p282 = pneg %p72
        %p283 = pneg %p69
        %p284 = pneg %p93
        %p285 = pneg %p90
        %p286 = pneg %p114
        %p287 = pneg %p111
        %p288 = pneg %p140
        %p289 = pneg %p137
        %s290 = sand.u32 %s127, 1
        %s291 = scalar_lea.sflag [#allocation4], %s290
        %s292 = sand.u32 %s127, 1
        %s293 = smul.addr %s292, 4
        %s294 = scalar_lea.vmem [#allocation10], %s293
        %s295 = smul.u32 4, %s25
        %s296 = smul.u32 4, %s25
        %s297 = smul.u32 4, %s25
        %v299 = vld [vmem:[%s244] sm:$0xff]
        %v300 = vld [vmem:[%s244 + $0x8] sm:$0xff]
        %v301 = vld [vmem:[%s244 + $0x10] sm:$0xff]
        %v302 = vld [vmem:[%s244 + $0x18] sm:$0xff]
        %v303 = vld [vmem:[%s244 + $0x20] sm:$0xff]
        %v304 = vld [vmem:[%s244 + $0x28] sm:$0xff]
        %v305 = vld [vmem:[%s244 + $0x30] sm:$0xff]
        %v306 = vld [vmem:[%s244 + $0x38] sm:$0xff]
        %v307 = vld [vmem:[%s244 + $0x40] sm:$0xff]
        %v308 = vld [vmem:[%s244 + $0x48] sm:$0xff]
        %v309 = vld [vmem:[%s244 + $0x50] sm:$0xff]
        %v310 = vld [vmem:[%s244 + $0x58] sm:$0xff]
        %v311 = vld [vmem:[%s244 + $0x60] sm:$0xff]
        %v312 = vld [vmem:[%s244 + $0x68] sm:$0xff]
        %v313 = vld [vmem:[%s244 + $0x70] sm:$0xff]
        %v314 = vld [vmem:[%s244 + $0x78] sm:$0xff]
        %v315 = vld [vmem:[%s244 + $0x80] sm:$0xff]
        %v316 = vld [vmem:[%s244 + $0x88] sm:$0xff]
        %v317 = vld [vmem:[%s244 + $0x90] sm:$0xff]
        %v318 = vld [vmem:[%s244 + $0x98] sm:$0xff]
        %v319 = vld [vmem:[%s254] sm:$0xf]
        %v320 = vld [vmem:[%s254 + $0x4] sm:$0xf]
        %v321 = vld [vmem:[%s254 + $0x8] sm:$0xf]
        %v322 = vld [vmem:[%s254 + $0xc] sm:$0xf]
        %v323 = vld [vmem:[%s254 + $0x10] sm:$0xf]
        %v324 = vld [vmem:[%s254 + $0x14] sm:$0xf]
        %v325 = vld [vmem:[%s254 + $0x18] sm:$0xf]
        %v326 = vld [vmem:[%s254 + $0x1c] sm:$0xf]
        %v327 = vld [vmem:[%s254 + $0x20] sm:$0xf]
        %v328 = vld [vmem:[%s254 + $0x24] sm:$0xf]
        %v329 = vld [vmem:[%s254 + $0x28] sm:$0xf]
        %v330 = vld [vmem:[%s254 + $0x2c] sm:$0xf]
        %v331 = vld [vmem:[%s254 + $0x30] sm:$0xf]
        %v332 = vld [vmem:[%s254 + $0x34] sm:$0xf]
        %v333 = vld [vmem:[%s254 + $0x38] sm:$0xf]
        %v334 = vld [vmem:[%s254 + $0x3c] sm:$0xf]
        %v335 = vld [vmem:[%s254 + $0x40] sm:$0xf]
        %v336 = vld [vmem:[%s254 + $0x44] sm:$0xf]
        %v337 = vld [vmem:[%s254 + $0x48] sm:$0xf]
        %v338 = vld [vmem:[%s254 + $0x4c] sm:$0xf]
        %v339 = vunpack.c.l.bf16 %v319
        %v340 = vunpack.c.l.bf16 %v320
        %v341 = vunpack.c.l.bf16 %v321
        %v342 = vunpack.c.l.bf16 %v322
        %v343 = vunpack.c.l.bf16 %v323
        %v344 = vunpack.c.l.bf16 %v324
        %v345 = vunpack.c.l.bf16 %v325
        %v346 = vunpack.c.l.bf16 %v326
        %v347 = vunpack.c.l.bf16 %v327
        %v348 = vunpack.c.l.bf16 %v328
        %v349 = vunpack.c.l.bf16 %v329
        %v350 = vunpack.c.l.bf16 %v330
        %v351 = vunpack.c.l.bf16 %v331
        %v352 = vunpack.c.l.bf16 %v332
        %v353 = vunpack.c.l.bf16 %v333
        %v354 = vunpack.c.l.bf16 %v334
        %v355 = vunpack.c.l.bf16 %v335
        %v356 = vunpack.c.l.bf16 %v336
        %v357 = vunpack.c.l.bf16 %v337
        %v358 = vunpack.c.l.bf16 %v338
        %v359 = vld [vmem:[#allocation7] sm:$0xf]
        %v360 = vld [vmem:[#allocation7 + $0x4] sm:$0xf]
        %v361 = vld [vmem:[#allocation7 + $0x8] sm:$0xf]
        %v362 = vld [vmem:[#allocation7 + $0xc] sm:$0xf]
        %v363 = vld [vmem:[#allocation7 + $0x10] sm:$0xf]
        %v364 = vld [vmem:[#allocation8] sm:$0xf]
        %v365 = vld [vmem:[#allocation8 + $0x4] sm:$0xf]
        %v366 = vld [vmem:[#allocation8 + $0x8] sm:$0xf]
        %v367 = vld [vmem:[#allocation8 + $0xc] sm:$0xf]
        %v368 = vld [vmem:[#allocation8 + $0x10] sm:$0xf]
        %v389 = vunpack.c.l.b16 %v319
        %v390 = vunpack.c.l.b16 %v320
        %v391 = vunpack.c.l.b16 %v321
        %v392 = vunpack.c.l.b16 %v322
        %v393 = vunpack.c.l.b16 %v323
        %v394 = vunpack.c.l.b16 %v324
        %v395 = vunpack.c.l.b16 %v325
        %v396 = vunpack.c.l.b16 %v326
        %v397 = vunpack.c.l.b16 %v327
        %v398 = vunpack.c.l.b16 %v328
        %v399 = vunpack.c.l.b16 %v329
        %v400 = vunpack.c.l.b16 %v330
        %v401 = vunpack.c.l.b16 %v331
        %v402 = vunpack.c.l.b16 %v332
        %v403 = vunpack.c.l.b16 %v333
        %v404 = vunpack.c.l.b16 %v334
        %v405 = vunpack.c.l.b16 %v335
        %v406 = vunpack.c.l.b16 %v336
        %v407 = vunpack.c.l.b16 %v337
        %v408 = vunpack.c.l.b16 %v338
        %v409 = vpack.c.b16 %v390, %v389
        %v410 = vpack.c.b16 %v392, %v391
        %v411 = vpack.c.b16 %v394, %v393
        %v412 = vpack.c.b16 %v396, %v395
        %v413 = vpack.c.b16 %v398, %v397
        %v414 = vpack.c.b16 %v400, %v399
        %v415 = vpack.c.b16 %v402, %v401
        %v416 = vpack.c.b16 %v404, %v403
        %v417 = vpack.c.b16 %v406, %v405
        %v418 = vpack.c.b16 %v408, %v407
        %v424 = vunpack.c.l.b16 %v359
        %v425 = vunpack.c.l.b16 %v360
        %v426 = vunpack.c.l.b16 %v361
        %v427 = vunpack.c.l.b16 %v362
        %v428 = vunpack.c.l.b16 %v363
        %v429 = vpack.c.b16 %v425, %v424
        %v430 = vpack.c.b16 %v427, %v426
        %v431 = vpack.c.b16 %v428, %v428
        %vm434 = vcmask 326656
        %v436 = vsel %vm434, %v409, 0
        %v439 = vsel %vm434, %v410, 0
        %v442 = vsel %vm434, %v411, 0
        %v445 = vsel %vm434, %v412, 0
        %v448 = vsel %vm434, %v413, 0
        %v451 = vsel %vm434, %v414, 0
        %v454 = vsel %vm434, %v415, 0
        %v457 = vsel %vm434, %v416, 0
        %v460 = vsel %vm434, %v417, 0
        %v463 = vsel %vm434, %v418, 0
        %vm465 = vcmask 1043456
        %v467 = vsel %vm465, %v431, 0
        %469 = vmatpush.bf16.msra.mxu0 0
        %470 = vmatpush.bf16.msra.mxu0 0
        %471 = vmatpush.bf16.msra.mxu0 0
        %472 = vmatpush.bf16.msra.mxu0 0
        %473 = vmatpush.bf16.msra.mxu0 0
        %474 = vmatpush.bf16.msra.mxu0 %v467
        %475 = vmatpush.bf16.msra.mxu0 %v430
        %476 = vmatpush.bf16.msra.mxu0 %v429
        %477 = vmatmul.bf16.gmra.mxu0 %v436
        %v478 = vpop.f32.mrf.mxu0
        %v479 = vadd.f32 0.0, %v478
        %v480 = vpop.f32.mrf.mxu0
        %v481 = vadd.f32 0.0, %v480
        %482 = vmatmul.bf16.gmra.mxu0 %v439
        %v483 = vpop.f32.mrf.mxu0
        %v484 = vadd.f32 0.0, %v483
        %v485 = vpop.f32.mrf.mxu0
        %v486 = vadd.f32 0.0, %v485
        %487 = vmatmul.bf16.gmra.mxu0 %v442
        %v488 = vpop.f32.mrf.mxu0
        %v489 = vadd.f32 0.0, %v488
        %v490 = vpop.f32.mrf.mxu0
        %v491 = vadd.f32 0.0, %v490
        %492 = vmatmul.bf16.gmra.mxu0 %v445
        %v493 = vpop.f32.mrf.mxu0
        %v494 = vadd.f32 0.0, %v493
        %v495 = vpop.f32.mrf.mxu0
        %v496 = vadd.f32 0.0, %v495
        %497 = vmatmul.bf16.gmra.mxu0 %v448
        %v498 = vpop.f32.mrf.mxu0
        %v499 = vadd.f32 0.0, %v498
        %v500 = vpop.f32.mrf.mxu0
        %v501 = vadd.f32 0.0, %v500
        %502 = vmatmul.bf16.gmra.mxu0 %v451
        %v503 = vpop.f32.mrf.mxu0
        %v504 = vadd.f32 0.0, %v503
        %v505 = vpop.f32.mrf.mxu0
        %v506 = vadd.f32 0.0, %v505
        %507 = vmatmul.bf16.gmra.mxu0 %v454
        %v508 = vpop.f32.mrf.mxu0
        %v509 = vadd.f32 0.0, %v508
        %v510 = vpop.f32.mrf.mxu0
        %v511 = vadd.f32 0.0, %v510
        %512 = vmatmul.bf16.gmra.mxu0 %v457
        %v513 = vpop.f32.mrf.mxu0
        %v514 = vadd.f32 0.0, %v513
        %v515 = vpop.f32.mrf.mxu0
        %v516 = vadd.f32 0.0, %v515
        %517 = vmatmul.bf16.gmra.mxu0 %v460
        %v518 = vpop.f32.mrf.mxu0
        %v519 = vadd.f32 0.0, %v518
        %v520 = vpop.f32.mrf.mxu0
        %v521 = vadd.f32 0.0, %v520
        %522 = vmatmul.bf16.gmra.mxu0 %v463
        %v523 = vpop.f32.mrf.mxu0
        %v524 = vadd.f32 0.0, %v523
        %v525 = vpop.f32.mrf.mxu0
        %v526 = vadd.f32 0.0, %v525
        %527 = vdwg.mxu0
        %v528 = vpack.c.bf16 %v479, %v479
        %v529 = vpack.c.bf16 %v481, %v481
        %v530 = vpack.c.bf16 %v484, %v484
        %v531 = vpack.c.bf16 %v486, %v486
        %v532 = vpack.c.bf16 %v489, %v489
        %v533 = vpack.c.bf16 %v491, %v491
        %v534 = vpack.c.bf16 %v494, %v494
        %v535 = vpack.c.bf16 %v496, %v496
        %v536 = vpack.c.bf16 %v499, %v499
        %v537 = vpack.c.bf16 %v501, %v501
        %v538 = vpack.c.bf16 %v504, %v504
        %v539 = vpack.c.bf16 %v506, %v506
        %v540 = vpack.c.bf16 %v509, %v509
        %v541 = vpack.c.bf16 %v511, %v511
        %v542 = vpack.c.bf16 %v514, %v514
        %v543 = vpack.c.bf16 %v516, %v516
        %v544 = vpack.c.bf16 %v519, %v519
        %v545 = vpack.c.bf16 %v521, %v521
        %v546 = vpack.c.bf16 %v524, %v524
        %v547 = vpack.c.bf16 %v526, %v526
        %v553 = vunpack.c.l.b16 %v364
        %v554 = vunpack.c.l.b16 %v365
        %v555 = vunpack.c.l.b16 %v366
        %v556 = vunpack.c.l.b16 %v367
        %v557 = vunpack.c.l.b16 %v368
        %v558 = vpack.c.b16 %v554, %v553
        %v559 = vpack.c.b16 %v556, %v555
        %v560 = vpack.c.b16 %v557, %v557
        %v566 = vunpack.c.l.b16 %v528
        %v567 = vunpack.c.l.b16 %v529
        %v568 = vunpack.c.l.b16 %v530
        %v569 = vunpack.c.l.b16 %v531
        %v570 = vunpack.c.l.b16 %v532
        %v571 = vpack.c.b16 %v567, %v566
        %v572 = vpack.c.b16 %v569, %v568
        %v573 = vpack.c.b16 %v570, %v570
        %v577 = vsel %vm434, %v558, 0
        %v580 = vsel %vm434, %v559, 0
        %v583 = vsel %vm434, %v560, 0
        %v586 = vsel %vm465, %v573, 0
        %588 = vmatpush.bf16.msra.mxu0 0
        %589 = vmatpush.bf16.msra.mxu0 0
        %590 = vmatpush.bf16.msra.mxu0 0
        %591 = vmatpush.bf16.msra.mxu0 0
        %592 = vmatpush.bf16.msra.mxu0 0
        %593 = vmatpush.bf16.msra.mxu0 %v586
        %594 = vmatpush.bf16.msra.mxu0 %v572
        %595 = vmatpush.bf16.msra.mxu0 %v571
        %596 = vmatmul.bf16.gmra.mxu0 %v577
        %v597 = vpop.f32.mrf.mxu0
        %v598 = vadd.f32 0.0, %v597
        %v599 = vpop.f32.mrf.mxu0
        %v600 = vadd.f32 0.0, %v599
        %601 = vmatmul.bf16.gmra.mxu0 %v580
        %v602 = vpop.f32.mrf.mxu0
        %v603 = vadd.f32 0.0, %v602
        %v604 = vpop.f32.mrf.mxu0
        %v605 = vadd.f32 0.0, %v604
        %606 = vmatmul.bf16.gmra.mxu0 %v583
        %v607 = vpop.f32.mrf.mxu0
        %v608 = vadd.f32 0.0, %v607
        %v609 = vpop.f32.mrf.mxu0
        %610 = vdwg.mxu0
        %v616 = vunpack.c.l.b16 %v533
        %v617 = vunpack.c.l.b16 %v534
        %v618 = vunpack.c.l.b16 %v535
        %v619 = vunpack.c.l.b16 %v536
        %v620 = vunpack.c.l.b16 %v537
        %v621 = vpack.c.b16 %v617, %v616
        %v622 = vpack.c.b16 %v619, %v618
        %v623 = vpack.c.b16 %v620, %v620
        %v627 = vsel %vm465, %v623, 0
        %629 = vmatpush.bf16.msra.mxu0 0
        %630 = vmatpush.bf16.msra.mxu0 0
        %631 = vmatpush.bf16.msra.mxu0 0
        %632 = vmatpush.bf16.msra.mxu0 0
        %633 = vmatpush.bf16.msra.mxu0 0
        %634 = vmatpush.bf16.msra.mxu0 %v627
        %635 = vmatpush.bf16.msra.mxu0 %v622
        %636 = vmatpush.bf16.msra.mxu0 %v621
        %637 = vmatmul.bf16.gmra.mxu0 %v577
        %v638 = vpop.f32.mrf.mxu0
        %v639 = vadd.f32 0.0, %v638
        %v640 = vpop.f32.mrf.mxu0
        %v641 = vadd.f32 0.0, %v640
        %642 = vmatmul.bf16.gmra.mxu0 %v580
        %v643 = vpop.f32.mrf.mxu0
        %v644 = vadd.f32 0.0, %v643
        %v645 = vpop.f32.mrf.mxu0
        %v646 = vadd.f32 0.0, %v645
        %647 = vmatmul.bf16.gmra.mxu0 %v583
        %v648 = vpop.f32.mrf.mxu0
        %v649 = vadd.f32 0.0, %v648
        %v650 = vpop.f32.mrf.mxu0
        %651 = vdwg.mxu0
        %v657 = vunpack.c.l.b16 %v538
        %v658 = vunpack.c.l.b16 %v539
        %v659 = vunpack.c.l.b16 %v540
        %v660 = vunpack.c.l.b16 %v541
        %v661 = vunpack.c.l.b16 %v542
        %v662 = vpack.c.b16 %v658, %v657
        %v663 = vpack.c.b16 %v660, %v659
        %v664 = vpack.c.b16 %v661, %v661
        %v668 = vsel %vm465, %v664, 0
        %670 = vmatpush.bf16.msra.mxu0 0
        %671 = vmatpush.bf16.msra.mxu0 0
        %672 = vmatpush.bf16.msra.mxu0 0
        %673 = vmatpush.bf16.msra.mxu0 0
        %674 = vmatpush.bf16.msra.mxu0 0
        %675 = vmatpush.bf16.msra.mxu0 %v668
        %676 = vmatpush.bf16.msra.mxu0 %v663
        %677 = vmatpush.bf16.msra.mxu0 %v662
        %678 = vmatmul.bf16.gmra.mxu0 %v577
        %v679 = vpop.f32.mrf.mxu0
        %v680 = vadd.f32 0.0, %v679
        %v681 = vpop.f32.mrf.mxu0
        %v682 = vadd.f32 0.0, %v681
        %683 = vmatmul.bf16.gmra.mxu0 %v580
        %v684 = vpop.f32.mrf.mxu0
        %v685 = vadd.f32 0.0, %v684
        %v686 = vpop.f32.mrf.mxu0
        %v687 = vadd.f32 0.0, %v686
        %688 = vmatmul.bf16.gmra.mxu0 %v583
        %v689 = vpop.f32.mrf.mxu0
        %v690 = vadd.f32 0.0, %v689
        %v691 = vpop.f32.mrf.mxu0
        %692 = vdwg.mxu0
        %v698 = vunpack.c.l.b16 %v543
        %v699 = vunpack.c.l.b16 %v544
        %v700 = vunpack.c.l.b16 %v545
        %v701 = vunpack.c.l.b16 %v546
        %v702 = vunpack.c.l.b16 %v547
        %v703 = vpack.c.b16 %v699, %v698
        %v704 = vpack.c.b16 %v701, %v700
        %v705 = vpack.c.b16 %v702, %v702
        %v709 = vsel %vm465, %v705, 0
        %711 = vmatpush.bf16.msra.mxu0 0
        %712 = vmatpush.bf16.msra.mxu0 0
        %713 = vmatpush.bf16.msra.mxu0 0
        %714 = vmatpush.bf16.msra.mxu0 0
        %715 = vmatpush.bf16.msra.mxu0 0
        %716 = vmatpush.bf16.msra.mxu0 %v709
        %717 = vmatpush.bf16.msra.mxu0 %v704
        %718 = vmatpush.bf16.msra.mxu0 %v703
        %719 = vmatmul.bf16.gmra.mxu0 %v577
        %v720 = vpop.f32.mrf.mxu0
        %v721 = vadd.f32 0.0, %v720
        %v722 = vpop.f32.mrf.mxu0
        %v723 = vadd.f32 0.0, %v722
        %724 = vmatmul.bf16.gmra.mxu0 %v580
        %v725 = vpop.f32.mrf.mxu0
        %v726 = vadd.f32 0.0, %v725
        %v727 = vpop.f32.mrf.mxu0
        %v728 = vadd.f32 0.0, %v727
        %729 = vmatmul.bf16.gmra.mxu0 %v583
        %v730 = vpop.f32.mrf.mxu0
        %v731 = vadd.f32 0.0, %v730
        %v732 = vpop.f32.mrf.mxu0
        %733 = vdwg.mxu0
        %v734 = vmul.f32 %v598, 0.0010405828
        %v735 = vmul.f32 %v600, 0.0010405828
        %v736 = vmul.f32 %v603, 0.0010405828
        %v737 = vmul.f32 %v605, 0.0010405828
        %v738 = vmul.f32 %v608, 0.0010405828
        %v739 = vmul.f32 %v639, 0.0010405828
        %v740 = vmul.f32 %v641, 0.0010405828
        %v741 = vmul.f32 %v644, 0.0010405828
        %v742 = vmul.f32 %v646, 0.0010405828
        %v743 = vmul.f32 %v649, 0.0010405828
        %v744 = vmul.f32 %v680, 0.0010405828
        %v745 = vmul.f32 %v682, 0.0010405828
        %v746 = vmul.f32 %v685, 0.0010405828
        %v747 = vmul.f32 %v687, 0.0010405828
        %v748 = vmul.f32 %v690, 0.0010405828
        %v749 = vmul.f32 %v721, 0.0010405828
        %v750 = vmul.f32 %v723, 0.0010405828
        %v751 = vmul.f32 %v726, 0.0010405828
        %v752 = vmul.f32 %v728, 0.0010405828
        %v753 = vmul.f32 %v731, 0.0010405828
        %v754 = vsub.f32 %v734, %v339
        %v755 = vsub.f32 %v735, %v340
        %v756 = vsub.f32 %v736, %v341
        %v757 = vsub.f32 %v737, %v342
        %v758 = vsub.f32 %v738, %v343
        %v759 = vsub.f32 %v739, %v344
        %v760 = vsub.f32 %v740, %v345
        %v761 = vsub.f32 %v741, %v346
        %v762 = vsub.f32 %v742, %v347
        %v763 = vsub.f32 %v743, %v348
        %v764 = vsub.f32 %v744, %v349
        %v765 = vsub.f32 %v745, %v350
        %v766 = vsub.f32 %v746, %v351
        %v767 = vsub.f32 %v747, %v352
        %v768 = vsub.f32 %v748, %v353
        %v769 = vsub.f32 %v749, %v354
        %v770 = vsub.f32 %v750, %v355
        %v771 = vsub.f32 %v751, %v356
        %v772 = vsub.f32 %v752, %v357
        %v773 = vsub.f32 %v753, %v358
        %v774 = vand.u32 2147483647, %v754
        %v775 = vand.u32 2147483647, %v755
        %v776 = vand.u32 2147483647, %v756
        %v777 = vand.u32 2147483647, %v757
        %v778 = vand.u32 2147483647, %v758
        %v779 = vand.u32 2147483647, %v759
        %v780 = vand.u32 2147483647, %v760
        %v781 = vand.u32 2147483647, %v761
        %v782 = vand.u32 2147483647, %v762
        %v783 = vand.u32 2147483647, %v763
        %v784 = vand.u32 2147483647, %v764
        %v785 = vand.u32 2147483647, %v765
        %v786 = vand.u32 2147483647, %v766
        %v787 = vand.u32 2147483647, %v767
        %v788 = vand.u32 2147483647, %v768
        %v789 = vand.u32 2147483647, %v769
        %v790 = vand.u32 2147483647, %v770
        %v791 = vand.u32 2147483647, %v771
        %v792 = vand.u32 2147483647, %v772
        %v793 = vand.u32 2147483647, %v773
        %v794 = vmul.f32 %v774, 5.0
        %v795 = vmul.f32 %v775, 5.0
        %v796 = vmul.f32 %v776, 5.0
        %v797 = vmul.f32 %v777, 5.0
        %v798 = vmul.f32 %v778, 5.0
        %v799 = vmul.f32 %v779, 5.0
        %v800 = vmul.f32 %v780, 5.0
        %v801 = vmul.f32 %v781, 5.0
        %v802 = vmul.f32 %v782, 5.0
        %v803 = vmul.f32 %v783, 5.0
        %v804 = vmul.f32 %v784, 5.0
        %v805 = vmul.f32 %v785, 5.0
        %v806 = vmul.f32 %v786, 5.0
        %v807 = vmul.f32 %v787, 5.0
        %v808 = vmul.f32 %v788, 5.0
        %v809 = vmul.f32 %v789, 5.0
        %v810 = vmul.f32 %v790, 5.0
        %v811 = vmul.f32 %v791, 5.0
        %v812 = vmul.f32 %v792, 5.0
        %v813 = vmul.f32 %v793, 5.0
        %v814 = vadd.f32 %v794, 1.0
        %v815 = vadd.f32 %v795, 1.0
        %v816 = vadd.f32 %v796, 1.0
        %v817 = vadd.f32 %v797, 1.0
        %v818 = vadd.f32 %v798, 1.0
        %v819 = vadd.f32 %v799, 1.0
        %v820 = vadd.f32 %v800, 1.0
        %v821 = vadd.f32 %v801, 1.0
        %v822 = vadd.f32 %v802, 1.0
        %v823 = vadd.f32 %v803, 1.0
        %v824 = vadd.f32 %v804, 1.0
        %v825 = vadd.f32 %v805, 1.0
        %v826 = vadd.f32 %v806, 1.0
        %v827 = vadd.f32 %v807, 1.0
        %v828 = vadd.f32 %v808, 1.0
        %v829 = vadd.f32 %v809, 1.0
        %v830 = vadd.f32 %v810, 1.0
        %v831 = vadd.f32 %v811, 1.0
        %v832 = vadd.f32 %v812, 1.0
        %v833 = vadd.f32 %v813, 1.0
        %v834 = vand.u32 2147483647, %v299
        %v835 = vand.u32 2147483647, %v300
        %v836 = vand.u32 2147483647, %v301
        %v837 = vand.u32 2147483647, %v302
        %v838 = vand.u32 2147483647, %v303
        %v839 = vand.u32 2147483647, %v304
        %v840 = vand.u32 2147483647, %v305
        %v841 = vand.u32 2147483647, %v306
        %v842 = vand.u32 2147483647, %v307
        %v843 = vand.u32 2147483647, %v308
        %v844 = vand.u32 2147483647, %v309
        %v845 = vand.u32 2147483647, %v310
        %v846 = vand.u32 2147483647, %v311
        %v847 = vand.u32 2147483647, %v312
        %v848 = vand.u32 2147483647, %v313
        %v849 = vand.u32 2147483647, %v314
        %v850 = vand.u32 2147483647, %v315
        %v851 = vand.u32 2147483647, %v316
        %v852 = vand.u32 2147483647, %v317
        %v853 = vand.u32 2147483647, %v318
        %v854 = vsub.f32 0.0, %v834
        %v855 = vsub.f32 0.0, %v835
        %v856 = vsub.f32 0.0, %v836
        %v857 = vsub.f32 0.0, %v837
        %v858 = vsub.f32 0.0, %v838
        %v859 = vsub.f32 0.0, %v839
        %v860 = vsub.f32 0.0, %v840
        %v861 = vsub.f32 0.0, %v841
        %v862 = vsub.f32 0.0, %v842
        %v863 = vsub.f32 0.0, %v843
        %v864 = vsub.f32 0.0, %v844
        %v865 = vsub.f32 0.0, %v845
        %v866 = vsub.f32 0.0, %v846
        %v867 = vsub.f32 0.0, %v847
        %v868 = vsub.f32 0.0, %v848
        %v869 = vsub.f32 0.0, %v849
        %v870 = vsub.f32 0.0, %v850
        %v871 = vsub.f32 0.0, %v851
        %v872 = vsub.f32 0.0, %v852
        %v873 = vsub.f32 0.0, %v853
        %v874 = vmul.f32 %v854, 1.442695
        %v875 = vpow.pop %v874
        %v876 = vmul.f32 %v855, 1.442695
        %v877 = vpow.pop %v876
        %v878 = vmul.f32 %v856, 1.442695
        %v879 = vpow.pop %v878
        %v880 = vmul.f32 %v857, 1.442695
        %v881 = vpow.pop %v880
        %v882 = vmul.f32 %v858, 1.442695
        %v883 = vpow.pop %v882
        %v884 = vmul.f32 %v859, 1.442695
        %v885 = vpow.pop %v884
        %v886 = vmul.f32 %v860, 1.442695
        %v887 = vpow.pop %v886
        %v888 = vmul.f32 %v861, 1.442695
        %v889 = vpow.pop %v888
        %v890 = vmul.f32 %v862, 1.442695
        %v891 = vpow.pop %v890
        %v892 = vmul.f32 %v863, 1.442695
        %v893 = vpow.pop %v892
        %v894 = vmul.f32 %v864, 1.442695
        %v895 = vpow.pop %v894
        %v896 = vmul.f32 %v865, 1.442695
        %v897 = vpow.pop %v896
        %v898 = vmul.f32 %v866, 1.442695
        %v899 = vpow.pop %v898
        %v900 = vmul.f32 %v867, 1.442695
        %v901 = vpow.pop %v900
        %v902 = vmul.f32 %v868, 1.442695
        %v903 = vpow.pop %v902
        %v904 = vmul.f32 %v869, 1.442695
        %v905 = vpow.pop %v904
        %v906 = vmul.f32 %v870, 1.442695
        %v907 = vpow.pop %v906
        %v908 = vmul.f32 %v871, 1.442695
        %v909 = vpow.pop %v908
        %v910 = vmul.f32 %v872, 1.442695
        %v911 = vpow.pop %v910
        %v912 = vmul.f32 %v873, 1.442695
        %v913 = vpow.pop %v912
        %v914 = vmax.f32 %v299, 0.0
        %v915 = vmax.f32 %v300, 0.0
        %v916 = vmax.f32 %v301, 0.0
        %v917 = vmax.f32 %v302, 0.0
        %v918 = vmax.f32 %v303, 0.0
        %v919 = vmax.f32 %v304, 0.0
        %v920 = vmax.f32 %v305, 0.0
        %v921 = vmax.f32 %v306, 0.0
        %v922 = vmax.f32 %v307, 0.0
        %v923 = vmax.f32 %v308, 0.0
        %v924 = vmax.f32 %v309, 0.0
        %v925 = vmax.f32 %v310, 0.0
        %v926 = vmax.f32 %v311, 0.0
        %v927 = vmax.f32 %v312, 0.0
        %v928 = vmax.f32 %v313, 0.0
        %v929 = vmax.f32 %v314, 0.0
        %v930 = vmax.f32 %v315, 0.0
        %v931 = vmax.f32 %v316, 0.0
        %v932 = vmax.f32 %v317, 0.0
        %v933 = vmax.f32 %v318, 0.0
        %v934 = vmul.f32 %v299, %v339
        %v935 = vmul.f32 %v300, %v340
        %v936 = vmul.f32 %v301, %v341
        %v937 = vmul.f32 %v302, %v342
        %v938 = vmul.f32 %v303, %v343
        %v939 = vmul.f32 %v304, %v344
        %v940 = vmul.f32 %v305, %v345
        %v941 = vmul.f32 %v306, %v346
        %v942 = vmul.f32 %v307, %v347
        %v943 = vmul.f32 %v308, %v348
        %v944 = vmul.f32 %v309, %v349
        %v945 = vmul.f32 %v310, %v350
        %v946 = vmul.f32 %v311, %v351
        %v947 = vmul.f32 %v312, %v352
        %v948 = vmul.f32 %v313, %v353
        %v949 = vmul.f32 %v314, %v354
        %v950 = vmul.f32 %v315, %v355
        %v951 = vmul.f32 %v316, %v356
        %v952 = vmul.f32 %v317, %v357
        %v953 = vmul.f32 %v318, %v358
        %v954 = vsub.f32 %v914, %v934
        %v955 = vsub.f32 %v915, %v935
        %v956 = vsub.f32 %v916, %v936
        %v957 = vsub.f32 %v917, %v937
        %v958 = vsub.f32 %v918, %v938
        %v959 = vsub.f32 %v919, %v939
        %v960 = vsub.f32 %v920, %v940
        %v961 = vsub.f32 %v921, %v941
        %v962 = vsub.f32 %v922, %v942
        %v963 = vsub.f32 %v923, %v943
        %v964 = vsub.f32 %v924, %v944
        %v965 = vsub.f32 %v925, %v945
        %v966 = vsub.f32 %v926, %v946
        %v967 = vsub.f32 %v927, %v947
        %v968 = vsub.f32 %v928, %v948
        %v969 = vsub.f32 %v929, %v949
        %v970 = vsub.f32 %v930, %v950
        %v971 = vsub.f32 %v931, %v951
        %v972 = vsub.f32 %v932, %v952
        %v973 = vsub.f32 %v933, %v953
        %v974 = vadd.f32 %v875, 1.0
        %v975 = vlog2.pop %v974
        %v976 = vmul.f32 %v975, 0.6931472
        %v977 = vmul.f32 -0.5, %v875
        %v978 = vadd.f32 %v977, 1.0
        %v979 = vmul.f32 %v978, %v875
        %v980 = vand.u32 2147483647, %v875
        %vm981 = vcmp.lt.f32.partialorder %v980, 0.0004427343
        %v982 = vsel %vm981, %v979, %v976
        %v983 = vadd.f32 %v877, 1.0
        %v984 = vlog2.pop %v983
        %v985 = vmul.f32 %v984, 0.6931472
        %v986 = vmul.f32 -0.5, %v877
        %v987 = vadd.f32 %v986, 1.0
        %v988 = vmul.f32 %v987, %v877
        %v989 = vand.u32 2147483647, %v877
        %vm990 = vcmp.lt.f32.partialorder %v989, 0.0004427343
        %v991 = vsel %vm990, %v988, %v985
        %v992 = vadd.f32 %v879, 1.0
        %v993 = vlog2.pop %v992
        %v994 = vmul.f32 %v993, 0.6931472
        %v995 = vmul.f32 -0.5, %v879
        %v996 = vadd.f32 %v995, 1.0
        %v997 = vmul.f32 %v996, %v879
        %v998 = vand.u32 2147483647, %v879
        %vm999 = vcmp.lt.f32.partialorder %v998, 0.0004427343
        %v1000 = vsel %vm999, %v997, %v994
        %v1001 = vadd.f32 %v881, 1.0
        %v1002 = vlog2.pop %v1001
        %v1003 = vmul.f32 %v1002, 0.6931472
        %v1004 = vmul.f32 -0.5, %v881
        %v1005 = vadd.f32 %v1004, 1.0
        %v1006 = vmul.f32 %v1005, %v881
        %v1007 = vand.u32 2147483647, %v881
        %vm1008 = vcmp.lt.f32.partialorder %v1007, 0.0004427343
        %v1009 = vsel %vm1008, %v1006, %v1003
        %v1010 = vadd.f32 %v883, 1.0
        %v1011 = vlog2.pop %v1010
        %v1012 = vmul.f32 %v1011, 0.6931472
        %v1013 = vmul.f32 -0.5, %v883
        %v1014 = vadd.f32 %v1013, 1.0
        %v1015 = vmul.f32 %v1014, %v883
        %v1016 = vand.u32 2147483647, %v883
        %vm1017 = vcmp.lt.f32.partialorder %v1016, 0.0004427343
        %v1018 = vsel %vm1017, %v1015, %v1012
        %v1019 = vadd.f32 %v885, 1.0
        %v1020 = vlog2.pop %v1019
        %v1021 = vmul.f32 %v1020, 0.6931472
        %v1022 = vmul.f32 -0.5, %v885
        %v1023 = vadd.f32 %v1022, 1.0
        %v1024 = vmul.f32 %v1023, %v885
        %v1025 = vand.u32 2147483647, %v885
        %vm1026 = vcmp.lt.f32.partialorder %v1025, 0.0004427343
        %v1027 = vsel %vm1026, %v1024, %v1021
        %v1028 = vadd.f32 %v887, 1.0
        %v1029 = vlog2.pop %v1028
        %v1030 = vmul.f32 %v1029, 0.6931472
        %v1031 = vmul.f32 -0.5, %v887
        %v1032 = vadd.f32 %v1031, 1.0
        %v1033 = vmul.f32 %v1032, %v887
        %v1034 = vand.u32 2147483647, %v887
        %vm1035 = vcmp.lt.f32.partialorder %v1034, 0.0004427343
        %v1036 = vsel %vm1035, %v1033, %v1030
        %v1037 = vadd.f32 %v889, 1.0
        %v1038 = vlog2.pop %v1037
        %v1039 = vmul.f32 %v1038, 0.6931472
        %v1040 = vmul.f32 -0.5, %v889
        %v1041 = vadd.f32 %v1040, 1.0
        %v1042 = vmul.f32 %v1041, %v889
        %v1043 = vand.u32 2147483647, %v889
        %vm1044 = vcmp.lt.f32.partialorder %v1043, 0.0004427343
        %v1045 = vsel %vm1044, %v1042, %v1039
        %v1046 = vadd.f32 %v891, 1.0
        %v1047 = vlog2.pop %v1046
        %v1048 = vmul.f32 %v1047, 0.6931472
        %v1049 = vmul.f32 -0.5, %v891
        %v1050 = vadd.f32 %v1049, 1.0
        %v1051 = vmul.f32 %v1050, %v891
        %v1052 = vand.u32 2147483647, %v891
        %vm1053 = vcmp.lt.f32.partialorder %v1052, 0.0004427343
        %v1054 = vsel %vm1053, %v1051, %v1048
        %v1055 = vadd.f32 %v893, 1.0
        %v1056 = vlog2.pop %v1055
        %v1057 = vmul.f32 %v1056, 0.6931472
        %v1058 = vmul.f32 -0.5, %v893
        %v1059 = vadd.f32 %v1058, 1.0
        %v1060 = vmul.f32 %v1059, %v893
        %v1061 = vand.u32 2147483647, %v893
        %vm1062 = vcmp.lt.f32.partialorder %v1061, 0.0004427343
        %v1063 = vsel %vm1062, %v1060, %v1057
        %v1064 = vadd.f32 %v895, 1.0
        %v1065 = vlog2.pop %v1064
        %v1066 = vmul.f32 %v1065, 0.6931472
        %v1067 = vmul.f32 -0.5, %v895
        %v1068 = vadd.f32 %v1067, 1.0
        %v1069 = vmul.f32 %v1068, %v895
        %v1070 = vand.u32 2147483647, %v895
        %vm1071 = vcmp.lt.f32.partialorder %v1070, 0.0004427343
        %v1072 = vsel %vm1071, %v1069, %v1066
        %v1073 = vadd.f32 %v897, 1.0
        %v1074 = vlog2.pop %v1073
        %v1075 = vmul.f32 %v1074, 0.6931472
        %v1076 = vmul.f32 -0.5, %v897
        %v1077 = vadd.f32 %v1076, 1.0
        %v1078 = vmul.f32 %v1077, %v897
        %v1079 = vand.u32 2147483647, %v897
        %vm1080 = vcmp.lt.f32.partialorder %v1079, 0.0004427343
        %v1081 = vsel %vm1080, %v1078, %v1075
        %v1082 = vadd.f32 %v899, 1.0
        %v1083 = vlog2.pop %v1082
        %v1084 = vmul.f32 %v1083, 0.6931472
        %v1085 = vmul.f32 -0.5, %v899
        %v1086 = vadd.f32 %v1085, 1.0
        %v1087 = vmul.f32 %v1086, %v899
        %v1088 = vand.u32 2147483647, %v899
        %vm1089 = vcmp.lt.f32.partialorder %v1088, 0.0004427343
        %v1090 = vsel %vm1089, %v1087, %v1084
        %v1091 = vadd.f32 %v901, 1.0
        %v1092 = vlog2.pop %v1091
        %v1093 = vmul.f32 %v1092, 0.6931472
        %v1094 = vmul.f32 -0.5, %v901
        %v1095 = vadd.f32 %v1094, 1.0
        %v1096 = vmul.f32 %v1095, %v901
        %v1097 = vand.u32 2147483647, %v901
        %vm1098 = vcmp.lt.f32.partialorder %v1097, 0.0004427343
        %v1099 = vsel %vm1098, %v1096, %v1093
        %v1100 = vadd.f32 %v903, 1.0
        %v1101 = vlog2.pop %v1100
        %v1102 = vmul.f32 %v1101, 0.6931472
        %v1103 = vmul.f32 -0.5, %v903
        %v1104 = vadd.f32 %v1103, 1.0
        %v1105 = vmul.f32 %v1104, %v903
        %v1106 = vand.u32 2147483647, %v903
        %vm1107 = vcmp.lt.f32.partialorder %v1106, 0.0004427343
        %v1108 = vsel %vm1107, %v1105, %v1102
        %v1109 = vadd.f32 %v905, 1.0
        %v1110 = vlog2.pop %v1109
        %v1111 = vmul.f32 %v1110, 0.6931472
        %v1112 = vmul.f32 -0.5, %v905
        %v1113 = vadd.f32 %v1112, 1.0
        %v1114 = vmul.f32 %v1113, %v905
        %v1115 = vand.u32 2147483647, %v905
        %vm1116 = vcmp.lt.f32.partialorder %v1115, 0.0004427343
        %v1117 = vsel %vm1116, %v1114, %v1111
        %v1118 = vadd.f32 %v907, 1.0
        %v1119 = vlog2.pop %v1118
        %v1120 = vmul.f32 %v1119, 0.6931472
        %v1121 = vmul.f32 -0.5, %v907
        %v1122 = vadd.f32 %v1121, 1.0
        %v1123 = vmul.f32 %v1122, %v907
        %v1124 = vand.u32 2147483647, %v907
        %vm1125 = vcmp.lt.f32.partialorder %v1124, 0.0004427343
        %v1126 = vsel %vm1125, %v1123, %v1120
        %v1127 = vadd.f32 %v909, 1.0
        %v1128 = vlog2.pop %v1127
        %v1129 = vmul.f32 %v1128, 0.6931472
        %v1130 = vmul.f32 -0.5, %v909
        %v1131 = vadd.f32 %v1130, 1.0
        %v1132 = vmul.f32 %v1131, %v909
        %v1133 = vand.u32 2147483647, %v909
        %vm1134 = vcmp.lt.f32.partialorder %v1133, 0.0004427343
        %v1135 = vsel %vm1134, %v1132, %v1129
        %v1136 = vadd.f32 %v911, 1.0
        %v1137 = vlog2.pop %v1136
        %v1138 = vmul.f32 %v1137, 0.6931472
        %v1139 = vmul.f32 -0.5, %v911
        %v1140 = vadd.f32 %v1139, 1.0
        %v1141 = vmul.f32 %v1140, %v911
        %v1142 = vand.u32 2147483647, %v911
        %vm1143 = vcmp.lt.f32.partialorder %v1142, 0.0004427343
        %v1144 = vsel %vm1143, %v1141, %v1138
        %v1145 = vadd.f32 %v913, 1.0
        %v1146 = vlog2.pop %v1145
        %v1147 = vmul.f32 %v1146, 0.6931472
        %v1148 = vmul.f32 -0.5, %v913
        %v1149 = vadd.f32 %v1148, 1.0
        %v1150 = vmul.f32 %v1149, %v913
        %v1151 = vand.u32 2147483647, %v913
        %vm1152 = vcmp.lt.f32.partialorder %v1151, 0.0004427343
        %v1153 = vsel %vm1152, %v1150, %v1147
        %v1154 = vadd.f32 %v954, %v982
        %v1155 = vadd.f32 %v955, %v991
        %v1156 = vadd.f32 %v956, %v1000
        %v1157 = vadd.f32 %v957, %v1009
        %v1158 = vadd.f32 %v958, %v1018
        %v1159 = vadd.f32 %v959, %v1027
        %v1160 = vadd.f32 %v960, %v1036
        %v1161 = vadd.f32 %v961, %v1045
        %v1162 = vadd.f32 %v962, %v1054
        %v1163 = vadd.f32 %v963, %v1063
        %v1164 = vadd.f32 %v964, %v1072
        %v1165 = vadd.f32 %v965, %v1081
        %v1166 = vadd.f32 %v966, %v1090
        %v1167 = vadd.f32 %v967, %v1099
        %v1168 = vadd.f32 %v968, %v1108
        %v1169 = vadd.f32 %v969, %v1117
        %v1170 = vadd.f32 %v970, %v1126
        %v1171 = vadd.f32 %v971, %v1135
        %v1172 = vadd.f32 %v972, %v1144
        %v1173 = vadd.f32 %v973, %v1153
        %v1174 = vsel %vm434, %v1154, 0.0
        %1175 = vadd.xlane.f32.xlu0 %v1174
        %v1176 = vpop.xlane.xlu0 %1175
        %v1177 = vsel %vm434, %v1155, 0.0
        %1178 = vadd.xlane.f32.xlu0 %v1177
        %v1179 = vpop.xlane.xlu0 %1178
        %v1180 = vsel %vm434, %v1156, 0.0
        %1181 = vadd.xlane.f32.xlu0 %v1180
        %v1182 = vpop.xlane.xlu0 %1181
        %v1183 = vsel %vm434, %v1157, 0.0
        %1184 = vadd.xlane.f32.xlu0 %v1183
        %v1185 = vpop.xlane.xlu0 %1184
        %v1186 = vsel %vm434, %v1158, 0.0
        %1187 = vadd.xlane.f32.xlu0 %v1186
        %v1188 = vpop.xlane.xlu0 %1187
        %v1189 = vsel %vm434, %v1159, 0.0
        %1190 = vadd.xlane.f32.xlu0 %v1189
        %v1191 = vpop.xlane.xlu0 %1190
        %v1192 = vsel %vm434, %v1160, 0.0
        %1193 = vadd.xlane.f32.xlu0 %v1192
        %v1194 = vpop.xlane.xlu0 %1193
        %v1195 = vsel %vm434, %v1161, 0.0
        %1196 = vadd.xlane.f32.xlu0 %v1195
        %v1197 = vpop.xlane.xlu0 %1196
        %v1198 = vsel %vm434, %v1162, 0.0
        %1199 = vadd.xlane.f32.xlu0 %v1198
        %v1200 = vpop.xlane.xlu0 %1199
        %v1201 = vsel %vm434, %v1163, 0.0
        %1202 = vadd.xlane.f32.xlu0 %v1201
        %v1203 = vpop.xlane.xlu0 %1202
        %v1204 = vsel %vm434, %v1164, 0.0
        %1205 = vadd.xlane.f32.xlu0 %v1204
        %v1206 = vpop.xlane.xlu0 %1205
        %v1207 = vsel %vm434, %v1165, 0.0
        %1208 = vadd.xlane.f32.xlu0 %v1207
        %v1209 = vpop.xlane.xlu0 %1208
        %v1210 = vsel %vm434, %v1166, 0.0
        %1211 = vadd.xlane.f32.xlu0 %v1210
        %v1212 = vpop.xlane.xlu0 %1211
        %v1213 = vsel %vm434, %v1167, 0.0
        %1214 = vadd.xlane.f32.xlu0 %v1213
        %v1215 = vpop.xlane.xlu0 %1214
        %v1216 = vsel %vm434, %v1168, 0.0
        %1217 = vadd.xlane.f32.xlu0 %v1216
        %v1218 = vpop.xlane.xlu0 %1217
        %v1219 = vsel %vm434, %v1169, 0.0
        %1220 = vadd.xlane.f32.xlu0 %v1219
        %v1221 = vpop.xlane.xlu0 %1220
        %v1222 = vsel %vm434, %v1170, 0.0
        %1223 = vadd.xlane.f32.xlu0 %v1222
        %v1224 = vpop.xlane.xlu0 %1223
        %v1225 = vsel %vm434, %v1171, 0.0
        %1226 = vadd.xlane.f32.xlu0 %v1225
        %v1227 = vpop.xlane.xlu0 %1226
        %v1228 = vsel %vm434, %v1172, 0.0
        %1229 = vadd.xlane.f32.xlu0 %v1228
        %v1230 = vpop.xlane.xlu0 %1229
        %v1231 = vsel %vm434, %v1173, 0.0
        %1232 = vadd.xlane.f32.xlu0 %v1231
        %v1233 = vpop.xlane.xlu0 %1232
        %v1234 = vadd.f32 %v1176, %v1179
        %v1235 = vadd.f32 %v1234, %v1182
        %v1236 = vadd.f32 %v1235, %v1185
        %v1237 = vadd.f32 %v1236, %v1188
        %v1238 = vrot.slane %v1237, 4
        %v1239 = vadd.f32 %v1237, %v1238
        %v1240 = vrot.slane %v1239, 2
        %v1241 = vadd.f32 %v1239, %v1240
        %v1242 = vrot.slane %v1241, 1
        %v1243 = vadd.f32 %v1241, %v1242
        %v1244 = vadd.f32 %v1191, %v1194
        %v1245 = vadd.f32 %v1244, %v1197
        %v1246 = vadd.f32 %v1245, %v1200
        %v1247 = vadd.f32 %v1246, %v1203
        %v1248 = vrot.slane %v1247, 4
        %v1249 = vadd.f32 %v1247, %v1248
        %v1250 = vrot.slane %v1249, 2
        %v1251 = vadd.f32 %v1249, %v1250
        %v1252 = vrot.slane %v1251, 1
        %v1253 = vadd.f32 %v1251, %v1252
        %v1254 = vadd.f32 %v1206, %v1209
        %v1255 = vadd.f32 %v1254, %v1212
        %v1256 = vadd.f32 %v1255, %v1215
        %v1257 = vadd.f32 %v1256, %v1218
        %v1258 = vrot.slane %v1257, 4
        %v1259 = vadd.f32 %v1257, %v1258
        %v1260 = vrot.slane %v1259, 2
        %v1261 = vadd.f32 %v1259, %v1260
        %v1262 = vrot.slane %v1261, 1
        %v1263 = vadd.f32 %v1261, %v1262
        %v1264 = vadd.f32 %v1221, %v1224
        %v1265 = vadd.f32 %v1264, %v1227
        %v1266 = vadd.f32 %v1265, %v1230
        %v1267 = vadd.f32 %v1266, %v1233
        %v1268 = vrot.slane %v1267, 4
        %v1269 = vadd.f32 %v1267, %v1268
        %v1270 = vrot.slane %v1269, 2
        %v1271 = vadd.f32 %v1269, %v1270
        %v1272 = vrot.slane %v1271, 1
        %v1273 = vadd.f32 %v1271, %v1272
        %v1274 = vadd.f32 %v875, 1.0
        %v1275 = vadd.f32 %v877, 1.0
        %v1276 = vadd.f32 %v879, 1.0
        %v1277 = vadd.f32 %v881, 1.0
        %v1278 = vadd.f32 %v883, 1.0
        %v1279 = vadd.f32 %v885, 1.0
        %v1280 = vadd.f32 %v887, 1.0
        %v1281 = vadd.f32 %v889, 1.0
        %v1282 = vadd.f32 %v891, 1.0
        %v1283 = vadd.f32 %v893, 1.0
        %v1284 = vadd.f32 %v895, 1.0
        %v1285 = vadd.f32 %v897, 1.0
        %v1286 = vadd.f32 %v899, 1.0
        %v1287 = vadd.f32 %v901, 1.0
        %v1288 = vadd.f32 %v903, 1.0
        %v1289 = vadd.f32 %v905, 1.0
        %v1290 = vadd.f32 %v907, 1.0
        %v1291 = vadd.f32 %v909, 1.0
        %v1292 = vadd.f32 %v911, 1.0
        %v1293 = vadd.f32 %v913, 1.0
        %v1294 = vrcp.pop %v1274
        %v1295 = vmul.f32 %v1274, %v1294
        %v1296 = vsub.f32 1.0, %v1295
        %v1297 = vmul.f32 %v1294, %v1296
        %v1298 = vadd.f32 %v1294, %v1297
        %vm1299 = vweird.f32 %v1274
        %vm1300 = vweird.f32 %v1294
        %vm1301 = vmor %vm1299, %vm1300
        %v1302 = vsel %vm1301, %v1294, %v1298
        %v1303 = vand.u32 2147483647, %v1274
        %vm1304 = vcmp.eq.f32.partialorder %v1303, 8.507059e+37
        %v1305 = vand.u32 %v1274, 2147483648
        %v1306 = vor.u32 1.1754944e-38, %v1305
        %v1307 = vsel %vm1304, %v1306, %v1302
        %v1308 = vmul.f32 1.0, %v1307
        %v1309 = vrcp.pop %v1275
        %v1310 = vmul.f32 %v1275, %v1309
        %v1311 = vsub.f32 1.0, %v1310
        %v1312 = vmul.f32 %v1309, %v1311
        %v1313 = vadd.f32 %v1309, %v1312
        %vm1314 = vweird.f32 %v1275
        %vm1315 = vweird.f32 %v1309
        %vm1316 = vmor %vm1314, %vm1315
        %v1317 = vsel %vm1316, %v1309, %v1313
        %v1318 = vand.u32 2147483647, %v1275
        %vm1319 = vcmp.eq.f32.partialorder %v1318, 8.507059e+37
        %v1320 = vand.u32 %v1275, 2147483648
        %v1321 = vor.u32 1.1754944e-38, %v1320
        %v1322 = vsel %vm1319, %v1321, %v1317
        %v1323 = vmul.f32 1.0, %v1322
        %v1324 = vrcp.pop %v1276
        %v1325 = vmul.f32 %v1276, %v1324
        %v1326 = vsub.f32 1.0, %v1325
        %v1327 = vmul.f32 %v1324, %v1326
        %v1328 = vadd.f32 %v1324, %v1327
        %vm1329 = vweird.f32 %v1276
        %vm1330 = vweird.f32 %v1324
        %vm1331 = vmor %vm1329, %vm1330
        %v1332 = vsel %vm1331, %v1324, %v1328
        %v1333 = vand.u32 2147483647, %v1276
        %vm1334 = vcmp.eq.f32.partialorder %v1333, 8.507059e+37
        %v1335 = vand.u32 %v1276, 2147483648
        %v1336 = vor.u32 1.1754944e-38, %v1335
        %v1337 = vsel %vm1334, %v1336, %v1332
        %v1338 = vmul.f32 1.0, %v1337
        %v1339 = vrcp.pop %v1277
        %v1340 = vmul.f32 %v1277, %v1339
        %v1341 = vsub.f32 1.0, %v1340
        %v1342 = vmul.f32 %v1339, %v1341
        %v1343 = vadd.f32 %v1339, %v1342
        %vm1344 = vweird.f32 %v1277
        %vm1345 = vweird.f32 %v1339
        %vm1346 = vmor %vm1344, %vm1345
        %v1347 = vsel %vm1346, %v1339, %v1343
        %v1348 = vand.u32 2147483647, %v1277
        %vm1349 = vcmp.eq.f32.partialorder %v1348, 8.507059e+37
        %v1350 = vand.u32 %v1277, 2147483648
        %v1351 = vor.u32 1.1754944e-38, %v1350
        %v1352 = vsel %vm1349, %v1351, %v1347
        %v1353 = vmul.f32 1.0, %v1352
        %v1354 = vrcp.pop %v1278
        %v1355 = vmul.f32 %v1278, %v1354
        %v1356 = vsub.f32 1.0, %v1355
        %v1357 = vmul.f32 %v1354, %v1356
        %v1358 = vadd.f32 %v1354, %v1357
        %vm1359 = vweird.f32 %v1278
        %vm1360 = vweird.f32 %v1354
        %vm1361 = vmor %vm1359, %vm1360
        %v1362 = vsel %vm1361, %v1354, %v1358
        %v1363 = vand.u32 2147483647, %v1278
        %vm1364 = vcmp.eq.f32.partialorder %v1363, 8.507059e+37
        %v1365 = vand.u32 %v1278, 2147483648
        %v1366 = vor.u32 1.1754944e-38, %v1365
        %v1367 = vsel %vm1364, %v1366, %v1362
        %v1368 = vmul.f32 1.0, %v1367
        %v1369 = vrcp.pop %v1279
        %v1370 = vmul.f32 %v1279, %v1369
        %v1371 = vsub.f32 1.0, %v1370
        %v1372 = vmul.f32 %v1369, %v1371
        %v1373 = vadd.f32 %v1369, %v1372
        %vm1374 = vweird.f32 %v1279
        %vm1375 = vweird.f32 %v1369
        %vm1376 = vmor %vm1374, %vm1375
        %v1377 = vsel %vm1376, %v1369, %v1373
        %v1378 = vand.u32 2147483647, %v1279
        %vm1379 = vcmp.eq.f32.partialorder %v1378, 8.507059e+37
        %v1380 = vand.u32 %v1279, 2147483648
        %v1381 = vor.u32 1.1754944e-38, %v1380
        %v1382 = vsel %vm1379, %v1381, %v1377
        %v1383 = vmul.f32 1.0, %v1382
        %v1384 = vrcp.pop %v1280
        %v1385 = vmul.f32 %v1280, %v1384
        %v1386 = vsub.f32 1.0, %v1385
        %v1387 = vmul.f32 %v1384, %v1386
        %v1388 = vadd.f32 %v1384, %v1387
        %vm1389 = vweird.f32 %v1280
        %vm1390 = vweird.f32 %v1384
        %vm1391 = vmor %vm1389, %vm1390
        %v1392 = vsel %vm1391, %v1384, %v1388
        %v1393 = vand.u32 2147483647, %v1280
        %vm1394 = vcmp.eq.f32.partialorder %v1393, 8.507059e+37
        %v1395 = vand.u32 %v1280, 2147483648
        %v1396 = vor.u32 1.1754944e-38, %v1395
        %v1397 = vsel %vm1394, %v1396, %v1392
        %v1398 = vmul.f32 1.0, %v1397
        %v1399 = vrcp.pop %v1281
        %v1400 = vmul.f32 %v1281, %v1399
        %v1401 = vsub.f32 1.0, %v1400
        %v1402 = vmul.f32 %v1399, %v1401
        %v1403 = vadd.f32 %v1399, %v1402
        %vm1404 = vweird.f32 %v1281
        %vm1405 = vweird.f32 %v1399
        %vm1406 = vmor %vm1404, %vm1405
        %v1407 = vsel %vm1406, %v1399, %v1403
        %v1408 = vand.u32 2147483647, %v1281
        %vm1409 = vcmp.eq.f32.partialorder %v1408, 8.507059e+37
        %v1410 = vand.u32 %v1281, 2147483648
        %v1411 = vor.u32 1.1754944e-38, %v1410
        %v1412 = vsel %vm1409, %v1411, %v1407
        %v1413 = vmul.f32 1.0, %v1412
        %v1414 = vrcp.pop %v1282
        %v1415 = vmul.f32 %v1282, %v1414
        %v1416 = vsub.f32 1.0, %v1415
        %v1417 = vmul.f32 %v1414, %v1416
        %v1418 = vadd.f32 %v1414, %v1417
        %vm1419 = vweird.f32 %v1282
        %vm1420 = vweird.f32 %v1414
        %vm1421 = vmor %vm1419, %vm1420
        %v1422 = vsel %vm1421, %v1414, %v1418
        %v1423 = vand.u32 2147483647, %v1282
        %vm1424 = vcmp.eq.f32.partialorder %v1423, 8.507059e+37
        %v1425 = vand.u32 %v1282, 2147483648
        %v1426 = vor.u32 1.1754944e-38, %v1425
        %v1427 = vsel %vm1424, %v1426, %v1422
        %v1428 = vmul.f32 1.0, %v1427
        %v1429 = vrcp.pop %v1283
        %v1430 = vmul.f32 %v1283, %v1429
        %v1431 = vsub.f32 1.0, %v1430
        %v1432 = vmul.f32 %v1429, %v1431
        %v1433 = vadd.f32 %v1429, %v1432
        %vm1434 = vweird.f32 %v1283
        %vm1435 = vweird.f32 %v1429
        %vm1436 = vmor %vm1434, %vm1435
        %v1437 = vsel %vm1436, %v1429, %v1433
        %v1438 = vand.u32 2147483647, %v1283
        %vm1439 = vcmp.eq.f32.partialorder %v1438, 8.507059e+37
        %v1440 = vand.u32 %v1283, 2147483648
        %v1441 = vor.u32 1.1754944e-38, %v1440
        %v1442 = vsel %vm1439, %v1441, %v1437
        %v1443 = vmul.f32 1.0, %v1442
        %v1444 = vrcp.pop %v1284
        %v1445 = vmul.f32 %v1284, %v1444
        %v1446 = vsub.f32 1.0, %v1445
        %v1447 = vmul.f32 %v1444, %v1446
        %v1448 = vadd.f32 %v1444, %v1447
        %vm1449 = vweird.f32 %v1284
        %vm1450 = vweird.f32 %v1444
        %vm1451 = vmor %vm1449, %vm1450
        %v1452 = vsel %vm1451, %v1444, %v1448
        %v1453 = vand.u32 2147483647, %v1284
        %vm1454 = vcmp.eq.f32.partialorder %v1453, 8.507059e+37
        %v1455 = vand.u32 %v1284, 2147483648
        %v1456 = vor.u32 1.1754944e-38, %v1455
        %v1457 = vsel %vm1454, %v1456, %v1452
        %v1458 = vmul.f32 1.0, %v1457
        %v1459 = vrcp.pop %v1285
        %v1460 = vmul.f32 %v1285, %v1459
        %v1461 = vsub.f32 1.0, %v1460
        %v1462 = vmul.f32 %v1459, %v1461
        %v1463 = vadd.f32 %v1459, %v1462
        %vm1464 = vweird.f32 %v1285
        %vm1465 = vweird.f32 %v1459
        %vm1466 = vmor %vm1464, %vm1465
        %v1467 = vsel %vm1466, %v1459, %v1463
        %v1468 = vand.u32 2147483647, %v1285
        %vm1469 = vcmp.eq.f32.partialorder %v1468, 8.507059e+37
        %v1470 = vand.u32 %v1285, 2147483648
        %v1471 = vor.u32 1.1754944e-38, %v1470
        %v1472 = vsel %vm1469, %v1471, %v1467
        %v1473 = vmul.f32 1.0, %v1472
        %v1474 = vrcp.pop %v1286
        %v1475 = vmul.f32 %v1286, %v1474
        %v1476 = vsub.f32 1.0, %v1475
        %v1477 = vmul.f32 %v1474, %v1476
        %v1478 = vadd.f32 %v1474, %v1477
        %vm1479 = vweird.f32 %v1286
        %vm1480 = vweird.f32 %v1474
        %vm1481 = vmor %vm1479, %vm1480
        %v1482 = vsel %vm1481, %v1474, %v1478
        %v1483 = vand.u32 2147483647, %v1286
        %vm1484 = vcmp.eq.f32.partialorder %v1483, 8.507059e+37
        %v1485 = vand.u32 %v1286, 2147483648
        %v1486 = vor.u32 1.1754944e-38, %v1485
        %v1487 = vsel %vm1484, %v1486, %v1482
        %v1488 = vmul.f32 1.0, %v1487
        %v1489 = vrcp.pop %v1287
        %v1490 = vmul.f32 %v1287, %v1489
        %v1491 = vsub.f32 1.0, %v1490
        %v1492 = vmul.f32 %v1489, %v1491
        %v1493 = vadd.f32 %v1489, %v1492
        %vm1494 = vweird.f32 %v1287
        %vm1495 = vweird.f32 %v1489
        %vm1496 = vmor %vm1494, %vm1495
        %v1497 = vsel %vm1496, %v1489, %v1493
        %v1498 = vand.u32 2147483647, %v1287
        %vm1499 = vcmp.eq.f32.partialorder %v1498, 8.507059e+37
        %v1500 = vand.u32 %v1287, 2147483648
        %v1501 = vor.u32 1.1754944e-38, %v1500
        %v1502 = vsel %vm1499, %v1501, %v1497
        %v1503 = vmul.f32 1.0, %v1502
        %v1504 = vrcp.pop %v1288
        %v1505 = vmul.f32 %v1288, %v1504
        %v1506 = vsub.f32 1.0, %v1505
        %v1507 = vmul.f32 %v1504, %v1506
        %v1508 = vadd.f32 %v1504, %v1507
        %vm1509 = vweird.f32 %v1288
        %vm1510 = vweird.f32 %v1504
        %vm1511 = vmor %vm1509, %vm1510
        %v1512 = vsel %vm1511, %v1504, %v1508
        %v1513 = vand.u32 2147483647, %v1288
        %vm1514 = vcmp.eq.f32.partialorder %v1513, 8.507059e+37
        %v1515 = vand.u32 %v1288, 2147483648
        %v1516 = vor.u32 1.1754944e-38, %v1515
        %v1517 = vsel %vm1514, %v1516, %v1512
        %v1518 = vmul.f32 1.0, %v1517
        %v1519 = vrcp.pop %v1289
        %v1520 = vmul.f32 %v1289, %v1519
        %v1521 = vsub.f32 1.0, %v1520
        %v1522 = vmul.f32 %v1519, %v1521
        %v1523 = vadd.f32 %v1519, %v1522
        %vm1524 = vweird.f32 %v1289
        %vm1525 = vweird.f32 %v1519
        %vm1526 = vmor %vm1524, %vm1525
        %v1527 = vsel %vm1526, %v1519, %v1523
        %v1528 = vand.u32 2147483647, %v1289
        %vm1529 = vcmp.eq.f32.partialorder %v1528, 8.507059e+37
        %v1530 = vand.u32 %v1289, 2147483648
        %v1531 = vor.u32 1.1754944e-38, %v1530
        %v1532 = vsel %vm1529, %v1531, %v1527
        %v1533 = vmul.f32 1.0, %v1532
        %v1534 = vrcp.pop %v1290
        %v1535 = vmul.f32 %v1290, %v1534
        %v1536 = vsub.f32 1.0, %v1535
        %v1537 = vmul.f32 %v1534, %v1536
        %v1538 = vadd.f32 %v1534, %v1537
        %vm1539 = vweird.f32 %v1290
        %vm1540 = vweird.f32 %v1534
        %vm1541 = vmor %vm1539, %vm1540
        %v1542 = vsel %vm1541, %v1534, %v1538
        %v1543 = vand.u32 2147483647, %v1290
        %vm1544 = vcmp.eq.f32.partialorder %v1543, 8.507059e+37
        %v1545 = vand.u32 %v1290, 2147483648
        %v1546 = vor.u32 1.1754944e-38, %v1545
        %v1547 = vsel %vm1544, %v1546, %v1542
        %v1548 = vmul.f32 1.0, %v1547
        %v1549 = vrcp.pop %v1291
        %v1550 = vmul.f32 %v1291, %v1549
        %v1551 = vsub.f32 1.0, %v1550
        %v1552 = vmul.f32 %v1549, %v1551
        %v1553 = vadd.f32 %v1549, %v1552
        %vm1554 = vweird.f32 %v1291
        %vm1555 = vweird.f32 %v1549
        %vm1556 = vmor %vm1554, %vm1555
        %v1557 = vsel %vm1556, %v1549, %v1553
        %v1558 = vand.u32 2147483647, %v1291
        %vm1559 = vcmp.eq.f32.partialorder %v1558, 8.507059e+37
        %v1560 = vand.u32 %v1291, 2147483648
        %v1561 = vor.u32 1.1754944e-38, %v1560
        %v1562 = vsel %vm1559, %v1561, %v1557
        %v1563 = vmul.f32 1.0, %v1562
        %v1564 = vrcp.pop %v1292
        %v1565 = vmul.f32 %v1292, %v1564
        %v1566 = vsub.f32 1.0, %v1565
        %v1567 = vmul.f32 %v1564, %v1566
        %v1568 = vadd.f32 %v1564, %v1567
        %vm1569 = vweird.f32 %v1292
        %vm1570 = vweird.f32 %v1564
        %vm1571 = vmor %vm1569, %vm1570
        %v1572 = vsel %vm1571, %v1564, %v1568
        %v1573 = vand.u32 2147483647, %v1292
        %vm1574 = vcmp.eq.f32.partialorder %v1573, 8.507059e+37
        %v1575 = vand.u32 %v1292, 2147483648
        %v1576 = vor.u32 1.1754944e-38, %v1575
        %v1577 = vsel %vm1574, %v1576, %v1572
        %v1578 = vmul.f32 1.0, %v1577
        %v1579 = vrcp.pop %v1293
        %v1580 = vmul.f32 %v1293, %v1579
        %v1581 = vsub.f32 1.0, %v1580
        %v1582 = vmul.f32 %v1579, %v1581
        %v1583 = vadd.f32 %v1579, %v1582
        %vm1584 = vweird.f32 %v1293
        %vm1585 = vweird.f32 %v1579
        %vm1586 = vmor %vm1584, %vm1585
        %v1587 = vsel %vm1586, %v1579, %v1583
        %v1588 = vand.u32 2147483647, %v1293
        %vm1589 = vcmp.eq.f32.partialorder %v1588, 8.507059e+37
        %v1590 = vand.u32 %v1293, 2147483648
        %v1591 = vor.u32 1.1754944e-38, %v1590
        %v1592 = vsel %vm1589, %v1591, %v1587
        %v1593 = vmul.f32 1.0, %v1592
        %vm1594 = vcmp.ge.f32.partialorder %v299, 0.0
        %vm1595 = vcmp.ge.f32.partialorder %v300, 0.0
        %vm1596 = vcmp.ge.f32.partialorder %v301, 0.0
        %vm1597 = vcmp.ge.f32.partialorder %v302, 0.0
        %vm1598 = vcmp.ge.f32.partialorder %v303, 0.0
        %vm1599 = vcmp.ge.f32.partialorder %v304, 0.0
        %vm1600 = vcmp.ge.f32.partialorder %v305, 0.0
        %vm1601 = vcmp.ge.f32.partialorder %v306, 0.0
        %vm1602 = vcmp.ge.f32.partialorder %v307, 0.0
        %vm1603 = vcmp.ge.f32.partialorder %v308, 0.0
        %vm1604 = vcmp.ge.f32.partialorder %v309, 0.0
        %vm1605 = vcmp.ge.f32.partialorder %v310, 0.0
        %vm1606 = vcmp.ge.f32.partialorder %v311, 0.0
        %vm1607 = vcmp.ge.f32.partialorder %v312, 0.0
        %vm1608 = vcmp.ge.f32.partialorder %v313, 0.0
        %vm1609 = vcmp.ge.f32.partialorder %v314, 0.0
        %vm1610 = vcmp.ge.f32.partialorder %v315, 0.0
        %vm1611 = vcmp.ge.f32.partialorder %v316, 0.0
        %vm1612 = vcmp.ge.f32.partialorder %v317, 0.0
        %vm1613 = vcmp.ge.f32.partialorder %v318, 0.0
        %v1614 = vmul.f32 %v875, %v1308
        %v1615 = vmul.f32 %v877, %v1323
        %v1616 = vmul.f32 %v879, %v1338
        %v1617 = vmul.f32 %v881, %v1353
        %v1618 = vmul.f32 %v883, %v1368
        %v1619 = vmul.f32 %v885, %v1383
        %v1620 = vmul.f32 %v887, %v1398
        %v1621 = vmul.f32 %v889, %v1413
        %v1622 = vmul.f32 %v891, %v1428
        %v1623 = vmul.f32 %v893, %v1443
        %v1624 = vmul.f32 %v895, %v1458
        %v1625 = vmul.f32 %v897, %v1473
        %v1626 = vmul.f32 %v899, %v1488
        %v1627 = vmul.f32 %v901, %v1503
        %v1628 = vmul.f32 %v903, %v1518
        %v1629 = vmul.f32 %v905, %v1533
        %v1630 = vmul.f32 %v907, %v1548
        %v1631 = vmul.f32 %v909, %v1563
        %v1632 = vmul.f32 %v911, %v1578
        %v1633 = vmul.f32 %v913, %v1593
        %v1634 = vsel %vm1594, %v1308, %v1614
        %v1635 = vsel %vm1595, %v1323, %v1615
        %v1636 = vsel %vm1596, %v1338, %v1616
        %v1637 = vsel %vm1597, %v1353, %v1617
        %v1638 = vsel %vm1598, %v1368, %v1618
        %v1639 = vsel %vm1599, %v1383, %v1619
        %v1640 = vsel %vm1600, %v1398, %v1620
        %v1641 = vsel %vm1601, %v1413, %v1621
        %v1642 = vsel %vm1602, %v1428, %v1622
        %v1643 = vsel %vm1603, %v1443, %v1623
        %v1644 = vsel %vm1604, %v1458, %v1624
        %v1645 = vsel %vm1605, %v1473, %v1625
        %v1646 = vsel %vm1606, %v1488, %v1626
        %v1647 = vsel %vm1607, %v1503, %v1627
        %v1648 = vsel %vm1608, %v1518, %v1628
        %v1649 = vsel %vm1609, %v1533, %v1629
        %v1650 = vsel %vm1610, %v1548, %v1630
        %v1651 = vsel %vm1611, %v1563, %v1631
        %v1652 = vsel %vm1612, %v1578, %v1632
        %v1653 = vsel %vm1613, %v1593, %v1633
        %v1654 = vmul.f32 %v1634, %v339
        %v1655 = vmul.f32 %v1635, %v340
        %v1656 = vmul.f32 %v1636, %v341
        %v1657 = vmul.f32 %v1637, %v342
        %v1658 = vmul.f32 %v1638, %v343
        %v1659 = vmul.f32 %v1639, %v344
        %v1660 = vmul.f32 %v1640, %v345
        %v1661 = vmul.f32 %v1641, %v346
        %v1662 = vmul.f32 %v1642, %v347
        %v1663 = vmul.f32 %v1643, %v348
        %v1664 = vmul.f32 %v1644, %v349
        %v1665 = vmul.f32 %v1645, %v350
        %v1666 = vmul.f32 %v1646, %v351
        %v1667 = vmul.f32 %v1647, %v352
        %v1668 = vmul.f32 %v1648, %v353
        %v1669 = vmul.f32 %v1649, %v354
        %v1670 = vmul.f32 %v1650, %v355
        %v1671 = vmul.f32 %v1651, %v356
        %v1672 = vmul.f32 %v1652, %v357
        %v1673 = vmul.f32 %v1653, %v358
        %v1674 = vmul.f32 %v1654, %v814
        %v1675 = vmul.f32 %v1655, %v815
        %v1676 = vmul.f32 %v1656, %v816
        %v1677 = vmul.f32 %v1657, %v817
        %v1678 = vmul.f32 %v1658, %v818
        %v1679 = vmul.f32 %v1659, %v819
        %v1680 = vmul.f32 %v1660, %v820
        %v1681 = vmul.f32 %v1661, %v821
        %v1682 = vmul.f32 %v1662, %v822
        %v1683 = vmul.f32 %v1663, %v823
        %v1684 = vmul.f32 %v1664, %v824
        %v1685 = vmul.f32 %v1665, %v825
        %v1686 = vmul.f32 %v1666, %v826
        %v1687 = vmul.f32 %v1667, %v827
        %v1688 = vmul.f32 %v1668, %v828
        %v1689 = vmul.f32 %v1669, %v829
        %v1690 = vmul.f32 %v1670, %v830
        %v1691 = vmul.f32 %v1671, %v831
        %v1692 = vmul.f32 %v1672, %v832
        %v1693 = vmul.f32 %v1673, %v833
        %v1694 = vsel %vm434, %v1674, 0.0
        %1695 = vadd.xlane.f32.xlu0 %v1694
        %v1696 = vpop.xlane.xlu0 %1695
        %v1697 = vsel %vm434, %v1675, 0.0
        %1698 = vadd.xlane.f32.xlu0 %v1697
        %v1699 = vpop.xlane.xlu0 %1698
        %v1700 = vsel %vm434, %v1676, 0.0
        %1701 = vadd.xlane.f32.xlu0 %v1700
        %v1702 = vpop.xlane.xlu0 %1701
        %v1703 = vsel %vm434, %v1677, 0.0
        %1704 = vadd.xlane.f32.xlu0 %v1703
        %v1705 = vpop.xlane.xlu0 %1704
        %v1706 = vsel %vm434, %v1678, 0.0
        %1707 = vadd.xlane.f32.xlu0 %v1706
        %v1708 = vpop.xlane.xlu0 %1707
        %v1709 = vsel %vm434, %v1679, 0.0
        %1710 = vadd.xlane.f32.xlu0 %v1709
        %v1711 = vpop.xlane.xlu0 %1710
        %v1712 = vsel %vm434, %v1680, 0.0
        %1713 = vadd.xlane.f32.xlu0 %v1712
        %v1714 = vpop.xlane.xlu0 %1713
        %v1715 = vsel %vm434, %v1681, 0.0
        %1716 = vadd.xlane.f32.xlu0 %v1715
        %v1717 = vpop.xlane.xlu0 %1716
        %v1718 = vsel %vm434, %v1682, 0.0
        %1719 = vadd.xlane.f32.xlu0 %v1718
        %v1720 = vpop.xlane.xlu0 %1719
        %v1721 = vsel %vm434, %v1683, 0.0
        %1722 = vadd.xlane.f32.xlu0 %v1721
        %v1723 = vpop.xlane.xlu0 %1722
        %v1724 = vsel %vm434, %v1684, 0.0
        %1725 = vadd.xlane.f32.xlu0 %v1724
        %v1726 = vpop.xlane.xlu0 %1725
        %v1727 = vsel %vm434, %v1685, 0.0
        %1728 = vadd.xlane.f32.xlu0 %v1727
        %v1729 = vpop.xlane.xlu0 %1728
        %v1730 = vsel %vm434, %v1686, 0.0
        %1731 = vadd.xlane.f32.xlu0 %v1730
        %v1732 = vpop.xlane.xlu0 %1731
        %v1733 = vsel %vm434, %v1687, 0.0
        %1734 = vadd.xlane.f32.xlu0 %v1733
        %v1735 = vpop.xlane.xlu0 %1734
        %v1736 = vsel %vm434, %v1688, 0.0
        %1737 = vadd.xlane.f32.xlu0 %v1736
        %v1738 = vpop.xlane.xlu0 %1737
        %v1739 = vsel %vm434, %v1689, 0.0
        %1740 = vadd.xlane.f32.xlu0 %v1739
        %v1741 = vpop.xlane.xlu0 %1740
        %v1742 = vsel %vm434, %v1690, 0.0
        %1743 = vadd.xlane.f32.xlu0 %v1742
        %v1744 = vpop.xlane.xlu0 %1743
        %v1745 = vsel %vm434, %v1691, 0.0
        %1746 = vadd.xlane.f32.xlu0 %v1745
        %v1747 = vpop.xlane.xlu0 %1746
        %v1748 = vsel %vm434, %v1692, 0.0
        %1749 = vadd.xlane.f32.xlu0 %v1748
        %v1750 = vpop.xlane.xlu0 %1749
        %v1751 = vsel %vm434, %v1693, 0.0
        %1752 = vadd.xlane.f32.xlu0 %v1751
        %v1753 = vpop.xlane.xlu0 %1752
        %v1754 = vadd.f32 %v1696, %v1699
        %v1755 = vadd.f32 %v1754, %v1702
        %v1756 = vadd.f32 %v1755, %v1705
        %v1757 = vadd.f32 %v1756, %v1708
        %v1758 = vrot.slane %v1757, 4
        %v1759 = vadd.f32 %v1757, %v1758
        %v1760 = vrot.slane %v1759, 2
        %v1761 = vadd.f32 %v1759, %v1760
        %v1762 = vrot.slane %v1761, 1
        %v1763 = vadd.f32 %v1761, %v1762
        %v1764 = vadd.f32 %v1711, %v1714
        %v1765 = vadd.f32 %v1764, %v1717
        %v1766 = vadd.f32 %v1765, %v1720
        %v1767 = vadd.f32 %v1766, %v1723
        %v1768 = vrot.slane %v1767, 4
        %v1769 = vadd.f32 %v1767, %v1768
        %v1770 = vrot.slane %v1769, 2
        %v1771 = vadd.f32 %v1769, %v1770
        %v1772 = vrot.slane %v1771, 1
        %v1773 = vadd.f32 %v1771, %v1772
        %v1774 = vadd.f32 %v1726, %v1729
        %v1775 = vadd.f32 %v1774, %v1732
        %v1776 = vadd.f32 %v1775, %v1735
        %v1777 = vadd.f32 %v1776, %v1738
        %v1778 = vrot.slane %v1777, 4
        %v1779 = vadd.f32 %v1777, %v1778
        %v1780 = vrot.slane %v1779, 2
        %v1781 = vadd.f32 %v1779, %v1780
        %v1782 = vrot.slane %v1781, 1
        %v1783 = vadd.f32 %v1781, %v1782
        %v1784 = vadd.f32 %v1741, %v1744
        %v1785 = vadd.f32 %v1784, %v1747
        %v1786 = vadd.f32 %v1785, %v1750
        %v1787 = vadd.f32 %v1786, %v1753
        %v1788 = vrot.slane %v1787, 4
        %v1789 = vadd.f32 %v1787, %v1788
        %v1790 = vrot.slane %v1789, 2
        %v1791 = vadd.f32 %v1789, %v1790
        %v1792 = vrot.slane %v1791, 1
        %v1793 = vadd.f32 %v1791, %v1792
        %v1794 = vadd.f32 %v1634, %v339
        %v1795 = vadd.f32 %v1635, %v340
        %v1796 = vadd.f32 %v1636, %v341
        %v1797 = vadd.f32 %v1637, %v342
        %v1798 = vadd.f32 %v1638, %v343
        %v1799 = vadd.f32 %v1639, %v344
        %v1800 = vadd.f32 %v1640, %v345
        %v1801 = vadd.f32 %v1641, %v346
        %v1802 = vadd.f32 %v1642, %v347
        %v1803 = vadd.f32 %v1643, %v348
        %v1804 = vadd.f32 %v1644, %v349
        %v1805 = vadd.f32 %v1645, %v350
        %v1806 = vadd.f32 %v1646, %v351
        %v1807 = vadd.f32 %v1647, %v352
        %v1808 = vadd.f32 %v1648, %v353
        %v1809 = vadd.f32 %v1649, %v354
        %v1810 = vadd.f32 %v1650, %v355
        %v1811 = vadd.f32 %v1651, %v356
        %v1812 = vadd.f32 %v1652, %v357
        %v1813 = vadd.f32 %v1653, %v358
        %v1814 = vmul.f32 %v1794, %v814
        %v1815 = vmul.f32 %v1795, %v815
        %v1816 = vmul.f32 %v1796, %v816
        %v1817 = vmul.f32 %v1797, %v817
        %v1818 = vmul.f32 %v1798, %v818
        %v1819 = vmul.f32 %v1799, %v819
        %v1820 = vmul.f32 %v1800, %v820
        %v1821 = vmul.f32 %v1801, %v821
        %v1822 = vmul.f32 %v1802, %v822
        %v1823 = vmul.f32 %v1803, %v823
        %v1824 = vmul.f32 %v1804, %v824
        %v1825 = vmul.f32 %v1805, %v825
        %v1826 = vmul.f32 %v1806, %v826
        %v1827 = vmul.f32 %v1807, %v827
        %v1828 = vmul.f32 %v1808, %v828
        %v1829 = vmul.f32 %v1809, %v829
        %v1830 = vmul.f32 %v1810, %v830
        %v1831 = vmul.f32 %v1811, %v831
        %v1832 = vmul.f32 %v1812, %v832
        %v1833 = vmul.f32 %v1813, %v833
        %v1834 = vsel %vm434, %v1814, 0.0
        %1835 = vadd.xlane.f32.xlu0 %v1834
        %v1836 = vpop.xlane.xlu0 %1835
        %v1837 = vsel %vm434, %v1815, 0.0
        %1838 = vadd.xlane.f32.xlu0 %v1837
        %v1839 = vpop.xlane.xlu0 %1838
        %v1840 = vsel %vm434, %v1816, 0.0
        %1841 = vadd.xlane.f32.xlu0 %v1840
        %v1842 = vpop.xlane.xlu0 %1841
        %v1843 = vsel %vm434, %v1817, 0.0
        %1844 = vadd.xlane.f32.xlu0 %v1843
        %v1845 = vpop.xlane.xlu0 %1844
        %v1846 = vsel %vm434, %v1818, 0.0
        %1847 = vadd.xlane.f32.xlu0 %v1846
        %v1848 = vpop.xlane.xlu0 %1847
        %v1849 = vsel %vm434, %v1819, 0.0
        %1850 = vadd.xlane.f32.xlu0 %v1849
        %v1851 = vpop.xlane.xlu0 %1850
        %v1852 = vsel %vm434, %v1820, 0.0
        %1853 = vadd.xlane.f32.xlu0 %v1852
        %v1854 = vpop.xlane.xlu0 %1853
        %v1855 = vsel %vm434, %v1821, 0.0
        %1856 = vadd.xlane.f32.xlu0 %v1855
        %v1857 = vpop.xlane.xlu0 %1856
        %v1858 = vsel %vm434, %v1822, 0.0
        %1859 = vadd.xlane.f32.xlu0 %v1858
        %v1860 = vpop.xlane.xlu0 %1859
        %v1861 = vsel %vm434, %v1823, 0.0
        %1862 = vadd.xlane.f32.xlu0 %v1861
        %v1863 = vpop.xlane.xlu0 %1862
        %v1864 = vsel %vm434, %v1824, 0.0
        %1865 = vadd.xlane.f32.xlu0 %v1864
        %v1866 = vpop.xlane.xlu0 %1865
        %v1867 = vsel %vm434, %v1825, 0.0
        %1868 = vadd.xlane.f32.xlu0 %v1867
        %v1869 = vpop.xlane.xlu0 %1868
        %v1870 = vsel %vm434, %v1826, 0.0
        %1871 = vadd.xlane.f32.xlu0 %v1870
        %v1872 = vpop.xlane.xlu0 %1871
        %v1873 = vsel %vm434, %v1827, 0.0
        %1874 = vadd.xlane.f32.xlu0 %v1873
        %v1875 = vpop.xlane.xlu0 %1874
        %v1876 = vsel %vm434, %v1828, 0.0
        %1877 = vadd.xlane.f32.xlu0 %v1876
        %v1878 = vpop.xlane.xlu0 %1877
        %v1879 = vsel %vm434, %v1829, 0.0
        %1880 = vadd.xlane.f32.xlu0 %v1879
        %v1881 = vpop.xlane.xlu0 %1880
        %v1882 = vsel %vm434, %v1830, 0.0
        %1883 = vadd.xlane.f32.xlu0 %v1882
        %v1884 = vpop.xlane.xlu0 %1883
        %v1885 = vsel %vm434, %v1831, 0.0
        %1886 = vadd.xlane.f32.xlu0 %v1885
        %v1887 = vpop.xlane.xlu0 %1886
        %v1888 = vsel %vm434, %v1832, 0.0
        %1889 = vadd.xlane.f32.xlu0 %v1888
        %v1890 = vpop.xlane.xlu0 %1889
        %v1891 = vsel %vm434, %v1833, 0.0
        %1892 = vadd.xlane.f32.xlu0 %v1891
        %v1893 = vpop.xlane.xlu0 %1892
        %v1894 = vadd.f32 %v1836, %v1839
        %v1895 = vadd.f32 %v1894, %v1842
        %v1896 = vadd.f32 %v1895, %v1845
        %v1897 = vadd.f32 %v1896, %v1848
        %v1898 = vrot.slane %v1897, 4
        %v1899 = vadd.f32 %v1897, %v1898
        %v1900 = vrot.slane %v1899, 2
        %v1901 = vadd.f32 %v1899, %v1900
        %v1902 = vrot.slane %v1901, 1
        %v1903 = vadd.f32 %v1901, %v1902
        %v1904 = vadd.f32 %v1851, %v1854
        %v1905 = vadd.f32 %v1904, %v1857
        %v1906 = vadd.f32 %v1905, %v1860
        %v1907 = vadd.f32 %v1906, %v1863
        %v1908 = vrot.slane %v1907, 4
        %v1909 = vadd.f32 %v1907, %v1908
        %v1910 = vrot.slane %v1909, 2
        %v1911 = vadd.f32 %v1909, %v1910
        %v1912 = vrot.slane %v1911, 1
        %v1913 = vadd.f32 %v1911, %v1912
        %v1914 = vadd.f32 %v1866, %v1869
        %v1915 = vadd.f32 %v1914, %v1872
        %v1916 = vadd.f32 %v1915, %v1875
        %v1917 = vadd.f32 %v1916, %v1878
        %v1918 = vrot.slane %v1917, 4
        %v1919 = vadd.f32 %v1917, %v1918
        %v1920 = vrot.slane %v1919, 2
        %v1921 = vadd.f32 %v1919, %v1920
        %v1922 = vrot.slane %v1921, 1
        %v1923 = vadd.f32 %v1921, %v1922
        %v1924 = vadd.f32 %v1881, %v1884
        %v1925 = vadd.f32 %v1924, %v1887
        %v1926 = vadd.f32 %v1925, %v1890
        %v1927 = vadd.f32 %v1926, %v1893
        %v1928 = vrot.slane %v1927, 4
        %v1929 = vadd.f32 %v1927, %v1928
        %v1930 = vrot.slane %v1929, 2
        %v1931 = vadd.f32 %v1929, %v1930
        %v1932 = vrot.slane %v1931, 1
        %v1933 = vadd.f32 %v1931, %v1932
        %v1934 = vlaneseq
        %v1935 = vand.u32 %v1934, 127
        %vm1936 = vcmp.eq.s32.totalorder %v1935, 0
        %vm1937 = vcmp.eq.s32.totalorder %v1935, 1
        %vm1938 = vcmp.eq.s32.totalorder %v1935, 2
        %v1939 = vsel %vm1938, %v1903, 0.0
        %v1940 = vsel %vm1938, %v1913, 0.0
        %v1941 = vsel %vm1938, %v1923, 0.0
        %v1942 = vsel %vm1938, %v1933, 0.0
        %v1943 = vsel %vm1937, %v1763, %v1939
        %v1944 = vsel %vm1937, %v1773, %v1940
        %v1945 = vsel %vm1937, %v1783, %v1941
        %v1946 = vsel %vm1937, %v1793, %v1942
        %v1947 = vsel %vm1936, %v1243, %v1943
        %v1948 = vsel %vm1936, %v1253, %v1944
        %v1949 = vsel %vm1936, %v1263, %v1945
        %v1950 = vsel %vm1936, %v1273, %v1946
        %1951 = vst [vmem:[%s294] sm:$0x1] %v1947
        %1952 = vst [vmem:[%s294 + $0x1] sm:$0x1] %v1948
        %1953 = vst [vmem:[%s294 + $0x2] sm:$0x1] %v1949
        %1954 = vst [vmem:[%s294 + $0x3] sm:$0x1] %v1950
        %s1955 = sand.u32 %s127, 1
        %s1956 = scalar_lea.sflag [#allocation4], %s1955
        %s1957 = sand.u32 %s127, 1
        %s1958 = smul.addr %s1957, 4
        %s1959 = scalar_lea.vmem [#allocation10], %s1958
        // Predicated region
        $region53: #{tpu_custom_call.1} parent=35 // pred_check
          %p1960 = pneg %p137
        $region54: #{tpu_custom_call.1} parent=35 // pred_check_branch
          %1962 = sbr.rel (%p1960) target = $region56
        $region55: #{tpu_custom_call.1} parent=35 // pred_region
          %s1963 = smul.u32 4, %s25
          %1965 = vsyncadd %s1956, 0
          %s1966 = scalar_lea.hbm %s4, %s1963
          %s1967 = sshll.u32 %s1959, 4
          %s1968 = int_to_ptr.vmem [resolvable:$true] %s1967
          %s1969 = sshll.u32 %s1966, 4
          %s1970 = int_to_ptr.hbm [resolvable:$true] %s1969
          %1975 = dma.vmem_to_hbm [thread:$0]  %s1968, 64, %s1970, %s1956, 16, 16, 1
        $region56: #{tpu_custom_call.1} parent=35 // pred_fallthru
          _
      $region36: #{tpu_custom_call.1} parent=5 // pred_fallthru
        _
      %p1976 = scmp.le.s32.totalorder 2, %s20
      // Predicated region
      $region57: #{tpu_custom_call.1} parent=5 // pred_check
        %p1977 = pneg %p1976
      $region58: #{tpu_custom_call.1} parent=5 // pred_check_branch
        %1979 = sbr.rel (%p1977) target = $region60
      $region59: #{tpu_custom_call.1} parent=5 // pred_region
        %s1980 = ssub.s32 %s20, 2
        // Predicated region
        $region61: #{tpu_custom_call.1} parent=59 // pred_check
          %p1981 = pneg %p143
        $region62: #{tpu_custom_call.1} parent=59 // pred_check_branch
          %1983 = sbr.rel (%p1981) target = $region64
        $region63: #{tpu_custom_call.1} parent=59 // pred_region
          %s1984 = sand.u32 %s128, 1
          %s1985 = scalar_lea.sflag [#allocation4], %s1984
          %s1986 = sand.u32 %s128, 1
          %s1987 = smul.addr %s1986, 4
          %s1988 = scalar_lea.vmem [#allocation10], %s1987
          %1990 = dma.done %s1985, 64
        $region64: #{tpu_custom_call.1} parent=59 // pred_fallthru
          _
      $region60: #{tpu_custom_call.1} parent=5 // pred_fallthru
        _
    $region6: #{tpu_custom_call.1} parent=1 // loop_footer
      %s24 = sadd.s32 1, %s20
    $region7: #{tpu_custom_call.1} parent=1 // loop_footer_branch
      %19 = sbr.rel target = $region3
    $region8: #{tpu_custom_call.1} parent=1 // loop_exit
      _
    %1991 = vsyncpa [#allocation3], 1
    %s1992 = scalar_lea.sflag [#allocation3], 1
    %1993 = vsyncpa %s1992, 1
    %1994 = vsyncpa [#allocation6], 1
    %s1995 = scalar_lea.sflag [#allocation6], 1
    %1996 = vsyncpa %s1995, 1
    %1997 = vsyncpa [#allocation9], 1
    %1998 = vsyncpa [#allocation4], 1
    %s1999 = scalar_lea.sflag [#allocation4], 1
    %2000 = vsyncpa %s1999, 1

</llo_original>
